<compile_context>
chip_gen: v5e
topology: v5e:2x2
jax: 0.10.0
libtpu: 0.0.40
codegen_flags: <defaults>
</compile_context>

<pallas_src>
import functools

import jax
import jax.numpy as jnp
from jax.experimental import pallas as pl
from jax.experimental.pallas import tpu as pltpu

LANE = 128
SUBLANE = 8
NEG_BIG = -1e30  # finite "-inf": exp() underflows to exactly 0, no NaN on all-masked rows


def _round_up(x, m):
    return (x + m - 1) // m * m


# --------------------------------------------------------------------------------------
# Kernel 1: Bahdanau attention (online softmax over S tiles) + fused single-step LSTM.
# --------------------------------------------------------------------------------------
def _attn_lstm_kernel(enc_ref, maskb_ref, emb_ref, state_ref,
                      wa_ref, ba_ref, wh_ref, bh_ref, dot_ref, wl_ref, bl_ref,
                      state_out_ref, scores_out_ref,
                      m_sc, l_sc, ctx_sc, hh_sc,
                      *, ts, Bp, Hp):
    s = pl.program_id(0)
    n_s = pl.num_programs(0)

    @pl.when(s == 0)
    def _():
        # init streaming-softmax accumulators + compute h0 @ W_hid once (constant over S)
        m_sc[...] = jnp.full_like(m_sc, NEG_BIG)
        l_sc[...] = jnp.zeros_like(l_sc)
        ctx_sc[...] = jnp.zeros_like(ctx_sc)
        hh_sc[...] = jnp.dot(state_ref[0, :, :].astype(jnp.bfloat16), wh_ref[...],
                             preferred_element_type=jnp.float32) + bh_ref[...]

    enc = enc_ref[...]                                   # (ts, Bp, Hp) bf16
    enc2d = enc.reshape(ts * Bp, Hp)                     # free view (Bp mult of 8)

    # ---- attention energies: bf16 MXU matmuls, f32 accumulation ----
    a = jnp.dot(enc2d, wa_ref[...], preferred_element_type=jnp.float32) + ba_ref[...]
    attn_h = jnp.tanh(a.reshape(ts, Bp, Hp) + hh_sc[...][None, :, :])   # (ts, Bp, Hp)

    # ---- dot-vector scoring on the MXU: dot_ref has the vector replicated across all
    # ---- output lanes, so scores come out lane-replicated -> no cross-lane reduces.
    scores = jnp.dot(attn_h.reshape(ts * Bp, Hp).astype(jnp.bfloat16), dot_ref[...],
                     preferred_element_type=jnp.float32)                # (ts*Bp, Hp)
    scores = scores.reshape(ts, Bp, Hp) + maskb_ref[...]                # (ts,Bp,1) bias bcast

    # compact scores writeback (lanes identical -> max over lanes is the value)
    scores_out_ref[...] = jnp.max(scores, axis=2, keepdims=True)        # (ts, Bp, 1)

    # ---- online softmax over source positions (LEADING axis) + streaming context ----
    m_t = jnp.max(scores, axis=0)                        # (Bp, Hp)
    e_t = jnp.exp(scores - m_t[None, :, :])              # (ts, Bp, Hp)
    l_t = jnp.sum(e_t, axis=0)                           # (Bp, Hp)
    ctx_t = jnp.sum(e_t * enc.astype(jnp.float32), axis=0)              # (Bp, Hp)

    m_new = jnp.maximum(m_sc[...], m_t)
    alpha = jnp.exp(m_sc[...] - m_new)
    beta = jnp.exp(m_t - m_new)
    l_sc[...] = alpha * l_sc[...] + beta * l_t
    ctx_sc[...] = alpha * ctx_sc[...] + beta * ctx_t
    m_sc[...] = m_new

    # ---- final tile: normalize context (exact divide) + fused single-step LSTM ----
    @pl.when(s == n_s - 1)
    def _():
        context = ctx_sc[...] / l_sc[...]                # l_sc lane-replicated per batch row
        h0 = state_ref[0, :, :]
        c0 = state_ref[1, :, :]
        x = jnp.concatenate([emb_ref[...], context, h0], axis=1)        # (Bp, Ep+2Hp)
        gates = jnp.dot(x.astype(jnp.bfloat16), wl_ref[...],
                        preferred_element_type=jnp.float32) + bl_ref[...]  # (Bp, 4Hp)
        i_g = jax.nn.sigmoid(gates[:, 0 * Hp:1 * Hp])    # 128-aligned slices -> free views
        f_g = jax.nn.sigmoid(gates[:, 1 * Hp:2 * Hp])
        g_g = jnp.tanh(gates[:, 2 * Hp:3 * Hp])
        o_g = jax.nn.sigmoid(gates[:, 3 * Hp:4 * Hp])
        c_new = f_g * c0 + i_g * g_g
        h_new = o_g * jnp.tanh(c_new)
        state_out_ref[0, :, :] = h_new
        state_out_ref[1, :, :] = c_new


# --------------------------------------------------------------------------------------
# Kernel 2: output projection, tiled over the vocabulary (parallel grid axis).
# --------------------------------------------------------------------------------------
def _proj_kernel(h_ref, w_ref, b_ref, out_ref):
    out_ref[...] = jnp.dot(h_ref[...].astype(jnp.bfloat16), w_ref[...],
                           preferred_element_type=jnp.float32) + b_ref[...]
    # TODO(synk): int8 (v5e/v6e) / fp8 (v7x) quantized w_out with per-tile scales would
    # halve the dominant weight DMA; kept bf16 here for generation-portability.


# --------------------------------------------------------------------------------------
# One-time prep (hoisted out of the decode step, per the perf review)
# --------------------------------------------------------------------------------------
def prepare_decoder_params(params, *, v_tile=512):
    """Pad + fuse + bf16-cast all decoder weights once per model (NOT per decode step)."""
    f32, bf16 = jnp.float32, jnp.bfloat16
    E = params["embedding"].shape[1]
    H = params["w_attn"].shape[0]
    V = params["w_out"].shape[1]
    Hp, Ep = _round_up(H, LANE), _round_up(E, LANE)
    Vp = _round_up(V, v_tile)

    def pad2(wm, r, c):
        return jnp.zeros((r, c), f32).at[:wm.shape[0], :wm.shape[1]].set(wm.astype(f32))

    wa = pad2(params["w_attn"], Hp, Hp).astype(bf16)
    ba = pad2(params["b_attn"], 1, Hp)
    wh = pad2(params["w_hid"], Hp, Hp).astype(bf16)
    bh = pad2(params["b_hid"], 1, Hp)

    dot_p = jnp.zeros((Hp,), f32).at[:H].set(params["dot_vector"][0])
    dot_rep = jnp.broadcast_to(dot_p[:, None], (Hp, Hp)).astype(bf16)   # lane-replicated

    # fused LSTM weight: rows = [embed | context | h_prev], cols = [i | f | g | o] (Hp each)
    w_ih, w_hh = params["w_ih"], params["w_hh"]          # (E+H, 4H), (H, 4H)
    b_ih, b_hh = params["b_ih"], params["b_hh"]          # (1, 4H)
    wl = jnp.zeros((Ep + 2 * Hp, 4 * Hp), f32)
    bl = jnp.zeros((1, 4 * Hp), f32)
    for g in range(4):
        src = slice(g * H, (g + 1) * H)
        dst = slice(g * Hp, g * Hp + H)
        wl = wl.at[:E, dst].set(w_ih[:E, src])
        wl = wl.at[Ep:Ep + H, dst].set(w_ih[E:E + H, src])
        wl = wl.at[Ep + Hp:Ep + Hp + H, dst].set(w_hh[:, src])
        bl = bl.at[:, dst].set(b_ih[:, src] + b_hh[:, src])
    wl = wl.astype(bf16)

    wout = pad2(params["w_out"], Hp, Vp).astype(bf16)
    bout = pad2(params["b_out"], 1, Vp)

    return dict(embedding=params["embedding"], wa=wa, ba=ba, wh=wh, bh=bh,
                dot_rep=dot_rep, wl=wl, bl=bl, wout=wout, bout=bout)


def prepare_encoder(encoder_outputs, mask=None, *, s_tile=16):
    """Once per source sequence: pad/cast encoder outputs to bf16 + compact mask bias."""
    f32, bf16 = jnp.float32, jnp.bfloat16
    S, B, H = encoder_outputs.shape
    Bp, Hp = _round_up(B, SUBLANE), _round_up(H, LANE)
    Sp = _round_up(S, s_tile)
    enc = jnp.zeros((Sp, Bp, Hp), bf16).at[:S, :B, :H].set(encoder_outputs.astype(bf16))
    bias = jnp.full((Sp, Bp), NEG_BIG, f32)              # padded rows/cols stay masked out
    if mask is None:
        bias = bias.at[:S, :B].set(0.0)
    else:
        bias = bias.at[:S, :B].set(jnp.where(mask != 0, NEG_BIG, 0.0).T.astype(f32))
    return enc, bias[:, :, None]                          # compact (Sp, Bp, 1) additive bias


def pack_state(hidden):
    h, c = hidden                                        # each (1, B, H)
    _, B, H = h.shape
    Bp, Hp = _round_up(B, SUBLANE), _round_up(H, LANE)
    st = jnp.zeros((2, Bp, Hp), jnp.float32)
    return st.at[0, :B, :H].set(h[0]).at[1, :B, :H].set(c[0])


def unpack_state(state, B, H):
    return state[0, :B, :H][None], state[1, :B, :H][None]


# --------------------------------------------------------------------------------------
# One decode step (equivalent to BahdanauAttentionDecoder.forward with seq_len == 1).
# State is kept packed/padded as (2, Bp, Hp) across steps; use pack_state/unpack_state.
# --------------------------------------------------------------------------------------
def bahdanau_decoder_step(decoder_input, state, enc, maskb, dec,
                          *, S, V, s_tile=16, v_tile=512):
    f32 = jnp.float32
    B = decoder_input.shape[0]
    Sp, Bp, Hp = enc.shape
    E = dec["embedding"].shape[1]
    Ep = _round_up(E, LANE)
    Vp = dec["wout"].shape[1]
    assert Sp % s_tile == 0 and Vp % v_tile == 0
    n_s, n_v = Sp // s_tile, Vp // v_tile

    # embedding gather (data-dependent; XLA glue) + tiny per-step padding
    emb = jnp.take(dec["embedding"], decoder_input[:, 0], axis=0).astype(f32)   # (B, E)
    emb_p = jnp.zeros((Bp, Ep), f32).at[:B, :E].set(emb)

    # ---- kernel 1: attention (online softmax over S tiles) + fused LSTM cell ----
    state_new, scores = pl.pallas_call(
        functools.partial(_attn_lstm_kernel, ts=s_tile, Bp=Bp, Hp=Hp),
        out_shape=(jax.ShapeDtypeStruct((2, Bp, Hp), f32),
                   jax.ShapeDtypeStruct((Sp, Bp, 1), f32)),
        grid=(n_s,),
        in_specs=[
            pl.BlockSpec((s_tile, Bp, Hp), lambda s: (s, 0, 0)),        # enc (bf16)
            pl.BlockSpec((s_tile, Bp, 1), lambda s: (s, 0, 0)),         # mask bias
            pl.BlockSpec((Bp, Ep), lambda s: (0, 0)),                   # embedded token
            pl.BlockSpec((2, Bp, Hp), lambda s: (0, 0, 0)),             # (h, c)
            pl.BlockSpec((Hp, Hp), lambda s: (0, 0)),                   # w_attn
            pl.BlockSpec((1, Hp), lambda s: (0, 0)),                    # b_attn
            pl.BlockSpec((Hp, Hp), lambda s: (0, 0)),                   # w_hid
            pl.BlockSpec((1, Hp), lambda s: (0, 0)),                    # b_hid
            pl.BlockSpec((Hp, Hp), lambda s: (0, 0)),                   # dot (replicated)
            pl.BlockSpec((Ep + 2 * Hp, 4 * Hp), lambda s: (0, 0)),      # fused LSTM W
            pl.BlockSpec((1, 4 * Hp), lambda s: (0, 0)),                # fused LSTM b
        ],
        out_specs=(
            pl.BlockSpec((2, Bp, Hp), lambda s: (0, 0, 0)),
            pl.BlockSpec((s_tile, Bp, 1), lambda s: (s, 0, 0)),
        ),
        scratch_shapes=[pltpu.VMEM((Bp, Hp), f32)] * 4,                 # m, l, ctx, hh
        input_output_aliases={3: 0},   # recurrent state updated in place
        compiler_params=pltpu.CompilerParams(
            dimension_semantics=("arbitrary",),
            vmem_limit_bytes=48 * 1024 * 1024),
    )(enc, maskb, emb_p, state, dec["wa"], dec["ba"], dec["wh"], dec["bh"],
      dec["dot_rep"], dec["wl"], dec["bl"])

    # ---- kernel 2: output projection, vocab-tiled with a parallel grid axis ----
    logits_full = pl.pallas_call(
        _proj_kernel,
        out_shape=jax.ShapeDtypeStruct((Bp, Vp), f32),
        grid=(n_v,),
        in_specs=[pl.BlockSpec((Bp, Hp), lambda j: (0, 0)),
                  pl.BlockSpec((Hp, v_tile), lambda j: (0, j)),
                  pl.BlockSpec((1, v_tile), lambda j: (0, j))],
        out_specs=pl.BlockSpec((Bp, v_tile), lambda j: (0, j)),
        compiler_params=pltpu.CompilerParams(
            dimension_semantics=("parallel",),
            vmem_limit_bytes=32 * 1024 * 1024),
    )(state_new[0], dec["wout"], dec["bout"])

    # ---- tiny XLA epilogue: un-pad + exact softmax on compact (S, B) scores ----
    logits = logits_full[:B, :V]
    attn_w = jax.nn.softmax(scores[:S, :B, 0], axis=0).T                # (B, S)
    return logits[None], state_new, attn_w


# --------------------------------------------------------------------------------------
# Pure-JAX reference mirroring the PyTorch forward (f32 everywhere, true -inf masking).
# --------------------------------------------------------------------------------------
def reference(decoder_input, hidden, enc, params, mask):
    h, c = hidden
    H = h.shape[-1]
    emb = jnp.take(params["embedding"], decoder_input[:, 0], axis=0)
    attn_hidden = enc @ params["w_attn"] + params["b_attn"][0]
    hidden_hidden = h[0] @ params["w_hid"] + params["b_hid"][0]
    attn_hidden = jnp.tanh(attn_hidden + hidden_hidden[None])
    scores = jnp.einsum("sbh,h->bs", attn_hidden, params["dot_vector"][0])
    scores = jnp.where(mask != 0, -jnp.inf, scores)
    w = jax.nn.softmax(scores, axis=-1)
    context = jnp.einsum("bs,sbh->bh", w, enc)
    x = jnp.concatenate([emb, context], axis=1)
    gates = (x @ params["w_ih"] + params["b_ih"][0]
             + h[0] @ params["w_hh"] + params["b_hh"][0])
    i_g, f_g, g_g, o_g = (gates[:, :H], gates[:, H:2 * H],
                          gates[:, 2 * H:3 * H], gates[:, 3 * H:])
    c_new = jax.nn.sigmoid(f_g) * c[0] + jax.nn.sigmoid(i_g) * jnp.tanh(g_g)
    h_new = jax.nn.sigmoid(o_g) * jnp.tanh(c_new)
    logits = h_new @ params["w_out"] + params["b_out"][0]
    return logits[None], (h_new[None], c_new[None]), w


def init_params(key, num_vocab, embedding_dim, hidden_size):
    V, E, H = num_vocab, embedding_dim, hidden_size
    keys = jax.random.split(key, 9)

    emb = jax.random.normal(keys[0], (V, E), jnp.float32) * 0.1
    emb = emb.at[0].set(0.0)                     # padding_idx=0

    def linear(k, d_in, d_out):
        bound = 1.0 / jnp.sqrt(jnp.float32(d_in))
        kw, kb = jax.random.split(k)
        w = jax.random.uniform(kw, (d_in, d_out), jnp.float32, -bound, bound)
        b = jax.random.uniform(kb, (1, d_out), jnp.float32, -bound, bound)
        return w, b

    w_hid, b_hid = linear(keys[1], H, H)         # hidden_linear
    w_attn, b_attn = linear(keys[2], H, H)       # attn_linear
    dot_vector = jax.random.normal(keys[3], (1, H), jnp.float32) / H

    bound = 1.0 / jnp.sqrt(jnp.float32(H))       # PyTorch LSTM init bound
    w_ih = jax.random.uniform(keys[4], (E + H, 4 * H), jnp.float32, -bound, bound)
    b_ih = jax.random.uniform(keys[5], (1, 4 * H), jnp.float32, -bound, bound)
    w_hh = jax.random.uniform(keys[6], (H, 4 * H), jnp.float32, -bound, bound)
    b_hh = jax.random.uniform(keys[7], (1, 4 * H), jnp.float32, -bound, bound)

    w_out, b_out = linear(keys[8], H, V)

    return dict(embedding=emb, w_hid=w_hid, b_hid=b_hid, w_attn=w_attn,
                b_attn=b_attn, dot_vector=dot_vector, w_ih=w_ih, b_ih=b_ih,
                w_hh=w_hh, b_hh=b_hh, w_out=w_out, b_out=b_out)


if __name__ == "__main__":
    # small but representative: S=24 exercises 3 S-tiles (online softmax carry),
    # V=1000 exercises 2 vocab tiles at the 512-wide projection tile.
    B, S, V, E, H = 2, 24, 1000, 16, 32
    S_TILE, V_TILE = 8, 512

    key = jax.random.PRNGKey(0)
    kp, ki, kh, kc, ke, km = jax.random.split(key, 6)

    params = init_params(kp, V, E, H)
    decoder_input = jax.random.randint(ki, (B, 1), 1, V)          # (batch, seq_len=1)
    h0 = jax.random.normal(kh, (1, B, H), jnp.float32)
    c0 = jax.random.normal(kc, (1, B, H), jnp.float32)
    encoder_outputs = jax.random.normal(ke, (S, B, H), jnp.float32)
    mask = (jax.random.uniform(km, (B, S)) < 0.25).astype(jnp.float32)
    mask = mask.at[:, 0].set(0.0)                                 # keep >=1 unmasked position

    # one-time prep (per model / per source sequence), hoisted out of the decode step
    dec_prep = prepare_decoder_params(params, v_tile=V_TILE)
    enc_prep, maskb = prepare_encoder(encoder_outputs, mask, s_tile=S_TILE)
    state0 = pack_state((h0, c0))

    step = jax.jit(functools.partial(bahdanau_decoder_step,
                                     S=S, V=V, s_tile=S_TILE, v_tile=V_TILE))
    out, state1, attn_w = step(decoder_input, state0, enc_prep, maskb, dec_prep)
    jax.block_until_ready((out, state1, attn_w))

    h1, c1 = unpack_state(state1, B, H)

    r_out, (r_h, r_c), r_w = reference(decoder_input, (h0, c0), encoder_outputs, params, mask)

    assert out.shape == (1, B, V) and h1.shape == (1, B, H) and attn_w.shape == (B, S)
    assert bool(jnp.all(jnp.isfinite(out)))
    # tolerances reflect bf16 MXU inputs / bf16 encoder streaming (f32 accumulation)
    assert bool(jnp.allclose(out, r_out, rtol=2e-2, atol=2e-2))
    assert bool(jnp.allclose(h1, r_h, rtol=2e-2, atol=2e-2))
    assert bool(jnp.allclose(c1, r_c, rtol=2e-2, atol=2e-2))
    assert bool(jnp.allclose(attn_w, r_w, rtol=2e-2, atol=2e-2))
    print("KERNEL_OK")
</pallas_src>

<mosaic_0001>
module attributes {stable_mosaic.version = 11 : i64} {
  func.func @_attn_lstm_kernel(%arg0: i32, %arg1: memref<8x8x128xbf16, #tpu.memory_space<vmem>>, %arg2: memref<8x8x1xf32, #tpu.memory_space<vmem>>, %arg3: memref<8x128xf32, #tpu.memory_space<vmem>>, %arg4: memref<2x8x128xf32, #tpu.memory_space<vmem>>, %arg5: memref<128x128xbf16, #tpu.memory_space<vmem>>, %arg6: memref<1x128xf32, #tpu.memory_space<vmem>>, %arg7: memref<128x128xbf16, #tpu.memory_space<vmem>>, %arg8: memref<1x128xf32, #tpu.memory_space<vmem>>, %arg9: memref<128x128xbf16, #tpu.memory_space<vmem>>, %arg10: memref<384x512xbf16, #tpu.memory_space<vmem>>, %arg11: memref<1x512xf32, #tpu.memory_space<vmem>>, %arg12: memref<2x8x128xf32, #tpu.memory_space<vmem>>, %arg13: memref<8x8x1xf32, #tpu.memory_space<vmem>>, %arg14: memref<8x128xf32, #tpu.memory_space<vmem>>, %arg15: memref<8x128xf32, #tpu.memory_space<vmem>>, %arg16: memref<8x128xf32, #tpu.memory_space<vmem>>, %arg17: memref<8x128xf32, #tpu.memory_space<vmem>>) attributes {dimension_semantics = [#tpu.dimension_semantics<arbitrary>], iteration_bounds = array<i64: 3>, scalar_prefetch = 0 : i64, scratch_operands = 4 : i64, tpu.core_type = #tpu.core_type<tc>, window_params = [{transform_indices = @transform_0, window_bounds = array<i64: 8, 8, 128>}, {transform_indices = @transform_1, window_bounds = array<i64: 8, 8, 1>}, {pipeline_mode = #tpu.pipeline_mode<synchronous>, transform_indices = @transform_2, window_bounds = array<i64: 8, 128>}, {pipeline_mode = #tpu.pipeline_mode<synchronous>, transform_indices = @transform_3, window_bounds = array<i64: 2, 8, 128>}, {pipeline_mode = #tpu.pipeline_mode<synchronous>, transform_indices = @transform_4, window_bounds = array<i64: 128, 128>}, {pipeline_mode = #tpu.pipeline_mode<synchronous>, transform_indices = @transform_5, window_bounds = array<i64: 1, 128>}, {pipeline_mode = #tpu.pipeline_mode<synchronous>, transform_indices = @transform_6, window_bounds = array<i64: 128, 128>}, {pipeline_mode = #tpu.pipeline_mode<synchronous>, transform_indices = @transform_7, window_bounds = array<i64: 1, 128>}, {pipeline_mode = #tpu.pipeline_mode<synchronous>, transform_indices = @transform_8, window_bounds = array<i64: 128, 128>}, {pipeline_mode = #tpu.pipeline_mode<synchronous>, transform_indices = @transform_9, window_bounds = array<i64: 384, 512>}, {pipeline_mode = #tpu.pipeline_mode<synchronous>, transform_indices = @transform_10, window_bounds = array<i64: 1, 512>}, {pipeline_mode = #tpu.pipeline_mode<synchronous>, transform_indices = @transform_11, window_bounds = array<i64: 2, 8, 128>}, {transform_indices = @transform_12, window_bounds = array<i64: 8, 8, 1>}]} {
    %c0_i32 = arith.constant 0 : i32
    %0 = arith.cmpi eq, %arg0, %c0_i32 : i32
    %1 = arith.extui %0 : i1 to i32
    %c0_i32_0 = arith.constant 0 : i32
    %2 = arith.cmpi ne, %1, %c0_i32_0 : i32
    scf.if %2 {
      %cst_37 = arith.constant -1.000000e+30 : f32
      %57 = vector.broadcast %cst_37 : f32 to vector<8x128xf32>
      %c0_38 = arith.constant 0 : index
      %c0_39 = arith.constant 0 : index
      %58 = vector.load %arg14[%c0_38, %c0_39] : memref<8x128xf32, #tpu.memory_space<vmem>>, vector<8x128xf32>
      tpu.vector_store %arg14[%c0_38, %c0_39], %57 {strides = array<i32>} : memref<8x128xf32, #tpu.memory_space<vmem>>, vector<8x128xf32>,
      %cst_40 = arith.constant 0.000000e+00 : f32
      %59 = vector.broadcast %cst_40 : f32 to vector<8x128xf32>
      %c0_41 = arith.constant 0 : index
      %c0_42 = arith.constant 0 : index
      %60 = vector.load %arg15[%c0_41, %c0_42] : memref<8x128xf32, #tpu.memory_space<vmem>>, vector<8x128xf32>
      tpu.vector_store %arg15[%c0_41, %c0_42], %59 {strides = array<i32>} : memref<8x128xf32, #tpu.memory_space<vmem>>, vector<8x128xf32>,
      %cst_43 = arith.constant 0.000000e+00 : f32
      %61 = vector.broadcast %cst_43 : f32 to vector<8x128xf32>
      %c0_44 = arith.constant 0 : index
      %c0_45 = arith.constant 0 : index
      %62 = vector.load %arg16[%c0_44, %c0_45] : memref<8x128xf32, #tpu.memory_space<vmem>>, vector<8x128xf32>
      tpu.vector_store %arg16[%c0_44, %c0_45], %61 {strides = array<i32>} : memref<8x128xf32, #tpu.memory_space<vmem>>, vector<8x128xf32>,
      %c0_46 = arith.constant 0 : index
      %c0_47 = arith.constant 0 : index
      %c0_48 = arith.constant 0 : index
      %63 = vector.load %arg4[%c0_46, %c0_47, %c0_48] : memref<2x8x128xf32, #tpu.memory_space<vmem>>, vector<1x8x128xf32>
      %64 = vector.shape_cast %63 : vector<1x8x128xf32> to vector<8x128xf32>
      %65 = arith.truncf %64 : vector<8x128xf32> to vector<8x128xbf16>
      %c0_49 = arith.constant 0 : index
      %c0_50 = arith.constant 0 : index
      %66 = vector.load %arg7[%c0_49, %c0_50] : memref<128x128xbf16, #tpu.memory_space<vmem>>, vector<128x128xbf16>
      %cst_51 = arith.constant dense<0.000000e+00> : vector<8x128xf32>
      %67 = tpu.matmul %65, %66, %cst_51 {dimension_numbers = #tpu.dot_dimension_numbers<[1], [0], [0], [1], [0, 0, 1, 1], [], []>} : vector<8x128xbf16>, vector<128x128xbf16>, vector<8x128xf32> -> vector<8x128xf32>
      %c0_52 = arith.constant 0 : index
      %c0_53 = arith.constant 0 : index
      %68 = vector.load %arg8[%c0_52, %c0_53] : memref<1x128xf32, #tpu.memory_space<vmem>>, vector<1x128xf32>
      %69 = vector.broadcast %68 : vector<1x128xf32> to vector<8x128xf32>
      %70 = arith.addf %67, %69 : vector<8x128xf32>
      %c0_54 = arith.constant 0 : index
      %c0_55 = arith.constant 0 : index
      %71 = vector.load %arg17[%c0_54, %c0_55] : memref<8x128xf32, #tpu.memory_space<vmem>>, vector<8x128xf32>
      tpu.vector_store %arg17[%c0_54, %c0_55], %70 {strides = array<i32>} : memref<8x128xf32, #tpu.memory_space<vmem>>, vector<8x128xf32>,
    } else {
    }
    %c0 = arith.constant 0 : index
    %c0_1 = arith.constant 0 : index
    %c0_2 = arith.constant 0 : index
    %3 = vector.load %arg1[%c0, %c0_1, %c0_2] : memref<8x8x128xbf16, #tpu.memory_space<vmem>>, vector<8x8x128xbf16>
    %4 = vector.shape_cast %3 : vector<8x8x128xbf16> to vector<64x128xbf16>
    %c0_3 = arith.constant 0 : index
    %c0_4 = arith.constant 0 : index
    %5 = vector.load %arg5[%c0_3, %c0_4] : memref<128x128xbf16, #tpu.memory_space<vmem>>, vector<128x128xbf16>
    %cst = arith.constant dense<0.000000e+00> : vector<64x128xf32>
    %6 = tpu.matmul %4, %5, %cst {dimension_numbers = #tpu.dot_dimension_numbers<[1], [0], [0], [1], [0, 0, 1, 1], [], []>} : vector<64x128xbf16>, vector<128x128xbf16>, vector<64x128xf32> -> vector<64x128xf32>
    %c0_5 = arith.constant 0 : index
    %c0_6 = arith.constant 0 : index
    %7 = vector.load %arg6[%c0_5, %c0_6] : memref<1x128xf32, #tpu.memory_space<vmem>>, vector<1x128xf32>
    %8 = vector.broadcast %7 : vector<1x128xf32> to vector<64x128xf32>
    %9 = arith.addf %6, %8 : vector<64x128xf32>
    %10 = vector.shape_cast %9 : vector<64x128xf32> to vector<8x8x128xf32>
    %c0_7 = arith.constant 0 : index
    %c0_8 = arith.constant 0 : index
    %11 = vector.load %arg17[%c0_7, %c0_8] : memref<8x128xf32, #tpu.memory_space<vmem>>, vector<8x128xf32>
    %12 = vector.shape_cast %11 : vector<8x128xf32> to vector<1x8x128xf32>
    %13 = vector.broadcast %12 : vector<1x8x128xf32> to vector<8x8x128xf32>
    %14 = arith.addf %10, %13 : vector<8x8x128xf32>
    %15 = math.tanh %14 : vector<8x8x128xf32>
    %16 = vector.shape_cast %15 : vector<8x8x128xf32> to vector<64x128xf32>
    %17 = arith.truncf %16 : vector<64x128xf32> to vector<64x128xbf16>
    %c0_9 = arith.constant 0 : index
    %c0_10 = arith.constant 0 : index
    %18 = vector.load %arg9[%c0_9, %c0_10] : memref<128x128xbf16, #tpu.memory_space<vmem>>, vector<128x128xbf16>
    %cst_11 = arith.constant dense<0.000000e+00> : vector<64x128xf32>
    %19 = tpu.matmul %17, %18, %cst_11 {dimension_numbers = #tpu.dot_dimension_numbers<[1], [0], [0], [1], [0, 0, 1, 1], [], []>} : vector<64x128xbf16>, vector<128x128xbf16>, vector<64x128xf32> -> vector<64x128xf32>
    %20 = vector.shape_cast %19 : vector<64x128xf32> to vector<8x8x128xf32>
    %c0_12 = arith.constant 0 : index
    %c0_13 = arith.constant 0 : index
    %c0_14 = arith.constant 0 : index
    %21 = vector.load %arg2[%c0_12, %c0_13, %c0_14] : memref<8x8x1xf32, #tpu.memory_space<vmem>>, vector<8x8x1xf32>
    %22 = vector.broadcast %21 : vector<8x8x1xf32> to vector<8x8x128xf32>
    %23 = arith.addf %20, %22 : vector<8x8x128xf32>
    %cst_15 = arith.constant dense<0xFF800000> : vector<8x8xf32>
    %24 = vector.multi_reduction <maximumf>, %23, %cst_15 [2] : vector<8x8x128xf32> to vector<8x8xf32>
    %25 = vector.shape_cast %24 : vector<8x8xf32> to vector<8x8x1xf32>
    %c0_16 = arith.constant 0 : index
    %c0_17 = arith.constant 0 : index
    %c0_18 = arith.constant 0 : index
    %26 = vector.load %arg13[%c0_16, %c0_17, %c0_18] : memref<8x8x1xf32, #tpu.memory_space<vmem>>, vector<8x8x1xf32>
    tpu.vector_store %arg13[%c0_16, %c0_17, %c0_18], %25 {strides = array<i32>} : memref<8x8x1xf32, #tpu.memory_space<vmem>>, vector<8x8x1xf32>,
    %cst_19 = arith.constant dense<0xFF800000> : vector<8x128xf32>
    %27 = vector.multi_reduction <maximumf>, %23, %cst_19 [0] : vector<8x8x128xf32> to vector<8x128xf32>
    %28 = vector.shape_cast %27 : vector<8x128xf32> to vector<1x8x128xf32>
    %29 = vector.broadcast %28 : vector<1x8x128xf32> to vector<8x8x128xf32>
    %30 = arith.subf %23, %29 : vector<8x8x128xf32>
    %31 = math.exp %30 : vector<8x8x128xf32>
    %cst_20 = arith.constant dense<0.000000e+00> : vector<8x128xf32>
    %32 = vector.multi_reduction <add>, %31, %cst_20 [0] : vector<8x8x128xf32> to vector<8x128xf32>
    %33 = arith.extf %3 : vector<8x8x128xbf16> to vector<8x8x128xf32>
    %34 = arith.mulf %31, %33 : vector<8x8x128xf32>
    %cst_21 = arith.constant dense<0.000000e+00> : vector<8x128xf32>
    %35 = vector.multi_reduction <add>, %34, %cst_21 [0] : vector<8x8x128xf32> to vector<8x128xf32>
    %c0_22 = arith.constant 0 : index
    %c0_23 = arith.constant 0 : index
    %36 = vector.load %arg14[%c0_22, %c0_23] : memref<8x128xf32, #tpu.memory_space<vmem>>, vector<8x128xf32>
    %37 = arith.maximumf %36, %27 : vector<8x128xf32>
    %c0_24 = arith.constant 0 : index
    %c0_25 = arith.constant 0 : index
    %38 = vector.load %arg14[%c0_24, %c0_25] : memref<8x128xf32, #tpu.memory_space<vmem>>, vector<8x128xf32>
    %39 = arith.subf %38, %37 : vector<8x128xf32>
    %40 = math.exp %39 : vector<8x128xf32>
    %41 = arith.subf %27, %37 : vector<8x128xf32>
    %42 = math.exp %41 : vector<8x128xf32>
    %c0_26 = arith.constant 0 : index
    %c0_27 = arith.constant 0 : index
    %43 = vector.load %arg15[%c0_26, %c0_27] : memref<8x128xf32, #tpu.memory_space<vmem>>, vector<8x128xf32>
    %44 = arith.mulf %40, %43 : vector<8x128xf32>
    %45 = arith.mulf %42, %32 : vector<8x128xf32>
    %46 = arith.addf %44, %45 : vector<8x128xf32>
    %c0_28 = arith.constant 0 : index
    %c0_29 = arith.constant 0 : index
    %47 = vector.load %arg15[%c0_28, %c0_29] : memref<8x128xf32, #tpu.memory_space<vmem>>, vector<8x128xf32>
    tpu.vector_store %arg15[%c0_28, %c0_29], %46 {strides = array<i32>} : memref<8x128xf32, #tpu.memory_space<vmem>>, vector<8x128xf32>,
    %c0_30 = arith.constant 0 : index
    %c0_31 = arith.constant 0 : index
    %48 = vector.load %arg16[%c0_30, %c0_31] : memref<8x128xf32, #tpu.memory_space<vmem>>, vector<8x128xf32>
    %49 = arith.mulf %40, %48 : vector<8x128xf32>
    %50 = arith.mulf %42, %35 : vector<8x128xf32>
    %51 = arith.addf %49, %50 : vector<8x128xf32>
    %c0_32 = arith.constant 0 : index
    %c0_33 = arith.constant 0 : index
    %52 = vector.load %arg16[%c0_32, %c0_33] : memref<8x128xf32, #tpu.memory_space<vmem>>, vector<8x128xf32>
    tpu.vector_store %arg16[%c0_32, %c0_33], %51 {strides = array<i32>} : memref<8x128xf32, #tpu.memory_space<vmem>>, vector<8x128xf32>,
    %c0_34 = arith.constant 0 : index
    %c0_35 = arith.constant 0 : index
    %53 = vector.load %arg14[%c0_34, %c0_35] : memref<8x128xf32, #tpu.memory_space<vmem>>, vector<8x128xf32>
    tpu.vector_store %arg14[%c0_34, %c0_35], %37 {strides = array<i32>} : memref<8x128xf32, #tpu.memory_space<vmem>>, vector<8x128xf32>,
    %c2_i32 = arith.constant 2 : i32
    %54 = arith.cmpi eq, %arg0, %c2_i32 : i32
    %55 = arith.extui %54 : i1 to i32
    %c0_i32_36 = arith.constant 0 : i32
    %56 = arith.cmpi ne, %55, %c0_i32_36 : i32
    scf.if %56 {
      %c0_37 = arith.constant 0 : index
      %c0_38 = arith.constant 0 : index
      %57 = vector.load %arg16[%c0_37, %c0_38] : memref<8x128xf32, #tpu.memory_space<vmem>>, vector<8x128xf32>
      %c0_39 = arith.constant 0 : index
      %c0_40 = arith.constant 0 : index
      %58 = vector.load %arg15[%c0_39, %c0_40] : memref<8x128xf32, #tpu.memory_space<vmem>>, vector<8x128xf32>
      %59 = arith.divf %57, %58 : vector<8x128xf32>
      %c0_41 = arith.constant 0 : index
      %c0_42 = arith.constant 0 : index
      %c0_43 = arith.constant 0 : index
      %60 = vector.load %arg4[%c0_41, %c0_42, %c0_43] : memref<2x8x128xf32, #tpu.memory_space<vmem>>, vector<1x8x128xf32>
      %61 = vector.shape_cast %60 : vector<1x8x128xf32> to vector<8x128xf32>
      %c1 = arith.constant 1 : index
      %c0_44 = arith.constant 0 : index
      %c0_45 = arith.constant 0 : index
      %62 = vector.load %arg4[%c1, %c0_44, %c0_45] : memref<2x8x128xf32, #tpu.memory_space<vmem>>, vector<1x8x128xf32>
      %63 = vector.shape_cast %62 : vector<1x8x128xf32> to vector<8x128xf32>
      %c0_46 = arith.constant 0 : index
      %c0_47 = arith.constant 0 : index
      %64 = vector.load %arg3[%c0_46, %c0_47] : memref<8x128xf32, #tpu.memory_space<vmem>>, vector<8x128xf32>
      %65 = tpu.concatenate %64, %59, %61 in 1 : vector<8x128xf32>, vector<8x128xf32>, vector<8x128xf32> -> vector<8x384xf32>
      %66 = arith.truncf %65 : vector<8x384xf32> to vector<8x384xbf16>
      %c0_48 = arith.constant 0 : index
      %c0_49 = arith.constant 0 : index
      %67 = vector.load %arg10[%c0_48, %c0_49] : memref<384x512xbf16, #tpu.memory_space<vmem>>, vector<384x512xbf16>
      %cst_50 = arith.constant dense<0.000000e+00> : vector<8x512xf32>
      %68 = tpu.matmul %66, %67, %cst_50 {dimension_numbers = #tpu.dot_dimension_numbers<[1], [0], [0], [1], [0, 0, 1, 1], [], []>} : vector<8x384xbf16>, vector<384x512xbf16>, vector<8x512xf32> -> vector<8x512xf32>
      %c0_51 = arith.constant 0 : index
      %c0_52 = arith.constant 0 : index
      %69 = vector.load %arg11[%c0_51, %c0_52] : memref<1x512xf32, #tpu.memory_space<vmem>>, vector<1x512xf32>
      %70 = vector.broadcast %69 : vector<1x512xf32> to vector<8x512xf32>
      %71 = arith.addf %68, %70 : vector<8x512xf32>
      %72 = vector.extract_strided_slice %71 {offsets = [0, 0], sizes = [8, 128], strides = [1, 1]} : vector<8x512xf32> to vector<8x128xf32>
      %73 = arith.negf %72 : vector<8x128xf32>
      %74 = math.exp %73 : vector<8x128xf32>
      %cst_53 = arith.constant 1.000000e+00 : f32
      %75 = vector.broadcast %cst_53 : f32 to vector<8x128xf32>
      %76 = arith.addf %75, %74 : vector<8x128xf32>
      %77 = arith.divf %75, %76 : vector<8x128xf32>
      %78 = vector.extract_strided_slice %71 {offsets = [0, 128], sizes = [8, 128], strides = [1, 1]} : vector<8x512xf32> to vector<8x128xf32>
      %79 = arith.negf %78 : vector<8x128xf32>
      %80 = math.exp %79 : vector<8x128xf32>
      %cst_54 = arith.constant 1.000000e+00 : f32
      %81 = vector.broadcast %cst_54 : f32 to vector<8x128xf32>
      %82 = arith.addf %81, %80 : vector<8x128xf32>
      %83 = arith.divf %81, %82 : vector<8x128xf32>
      %84 = vector.extract_strided_slice %71 {offsets = [0, 256], sizes = [8, 128], strides = [1, 1]} : vector<8x512xf32> to vector<8x128xf32>
      %85 = math.tanh %84 : vector<8x128xf32>
      %86 = vector.extract_strided_slice %71 {offsets = [0, 384], sizes = [8, 128], strides = [1, 1]} : vector<8x512xf32> to vector<8x128xf32>
      %87 = arith.negf %86 : vector<8x128xf32>
      %88 = math.exp %87 : vector<8x128xf32>
      %cst_55 = arith.constant 1.000000e+00 : f32
      %89 = vector.broadcast %cst_55 : f32 to vector<8x128xf32>
      %90 = arith.addf %89, %88 : vector<8x128xf32>
      %91 = arith.divf %89, %90 : vector<8x128xf32>
      %92 = arith.mulf %83, %63 : vector<8x128xf32>
      %93 = arith.mulf %77, %85 : vector<8x128xf32>
      %94 = arith.addf %92, %93 : vector<8x128xf32>
      %95 = math.tanh %94 : vector<8x128xf32>
      %96 = arith.mulf %91, %95 : vector<8x128xf32>
      %c0_56 = arith.constant 0 : index
      %c0_57 = arith.constant 0 : index
      %c0_58 = arith.constant 0 : index
      %97 = vector.load %arg12[%c0_56, %c0_57, %c0_58] : memref<2x8x128xf32, #tpu.memory_space<vmem>>, vector<1x8x128xf32>
      %98 = vector.shape_cast %97 : vector<1x8x128xf32> to vector<8x128xf32>
      %99 = vector.shape_cast %96 : vector<8x128xf32> to vector<1x8x128xf32>
      tpu.vector_store %arg12[%c0_56, %c0_57, %c0_58], %99 {strides = array<i32>} : memref<2x8x128xf32, #tpu.memory_space<vmem>>, vector<1x8x128xf32>,
      %c1_59 = arith.constant 1 : index
      %c0_60 = arith.constant 0 : index
      %c0_61 = arith.constant 0 : index
      %100 = vector.load %arg12[%c1_59, %c0_60, %c0_61] : memref<2x8x128xf32, #tpu.memory_space<vmem>>, vector<1x8x128xf32>
      %101 = vector.shape_cast %100 : vector<1x8x128xf32> to vector<8x128xf32>
      %102 = vector.shape_cast %94 : vector<8x128xf32> to vector<1x8x128xf32>
      tpu.vector_store %arg12[%c1_59, %c0_60, %c0_61], %102 {strides = array<i32>} : memref<2x8x128xf32, #tpu.memory_space<vmem>>, vector<1x8x128xf32>,
    } else {
    }
    return
  }
  func.func @transform_0(%arg0: i32) -> (i32, i32, i32) {
    %c0_i32 = arith.constant 0 : i32
    %c0_i32_0 = arith.constant 0 : i32
    %c0_i32_1 = arith.constant 0 : i32
    return %arg0, %c0_i32, %c0_i32_0 : i32, i32, i32
  }
  func.func @transform_1(%arg0: i32) -> (i32, i32, i32) {
    %c0_i32 = arith.constant 0 : i32
    %c0_i32_0 = arith.constant 0 : i32
    %c0_i32_1 = arith.constant 0 : i32
    return %arg0, %c0_i32, %c0_i32_0 : i32, i32, i32
  }
  func.func @transform_2(%arg0: i32) -> (i32, i32) {
    %c0_i32 = arith.constant 0 : i32
    %c0_i32_0 = arith.constant 0 : i32
    %c0_i32_1 = arith.constant 0 : i32
    return %c0_i32, %c0_i32_0 : i32, i32
  }
  func.func @transform_3(%arg0: i32) -> (i32, i32, i32) {
    %c0_i32 = arith.constant 0 : i32
    %c0_i32_0 = arith.constant 0 : i32
    %c0_i32_1 = arith.constant 0 : i32
    %c0_i32_2 = arith.constant 0 : i32
    return %c0_i32, %c0_i32_0, %c0_i32_1 : i32, i32, i32
  }
  func.func @transform_4(%arg0: i32) -> (i32, i32) {
    %c0_i32 = arith.constant 0 : i32
    %c0_i32_0 = arith.constant 0 : i32
    %c0_i32_1 = arith.constant 0 : i32
    return %c0_i32, %c0_i32_0 : i32, i32
  }
  func.func @transform_5(%arg0: i32) -> (i32, i32) {
    %c0_i32 = arith.constant 0 : i32
    %c0_i32_0 = arith.constant 0 : i32
    %c0_i32_1 = arith.constant 0 : i32
    return %c0_i32, %c0_i32_0 : i32, i32
  }
  func.func @transform_6(%arg0: i32) -> (i32, i32) {
    %c0_i32 = arith.constant 0 : i32
    %c0_i32_0 = arith.constant 0 : i32
    %c0_i32_1 = arith.constant 0 : i32
    return %c0_i32, %c0_i32_0 : i32, i32
  }
  func.func @transform_7(%arg0: i32) -> (i32, i32) {
    %c0_i32 = arith.constant 0 : i32
    %c0_i32_0 = arith.constant 0 : i32
    %c0_i32_1 = arith.constant 0 : i32
    return %c0_i32, %c0_i32_0 : i32, i32
  }
  func.func @transform_8(%arg0: i32) -> (i32, i32) {
    %c0_i32 = arith.constant 0 : i32
    %c0_i32_0 = arith.constant 0 : i32
    %c0_i32_1 = arith.constant 0 : i32
    return %c0_i32, %c0_i32_0 : i32, i32
  }
  func.func @transform_9(%arg0: i32) -> (i32, i32) {
    %c0_i32 = arith.constant 0 : i32
    %c0_i32_0 = arith.constant 0 : i32
    %c0_i32_1 = arith.constant 0 : i32
    return %c0_i32, %c0_i32_0 : i32, i32
  }
  func.func @transform_10(%arg0: i32) -> (i32, i32) {
    %c0_i32 = arith.constant 0 : i32
    %c0_i32_0 = arith.constant 0 : i32
    %c0_i32_1 = arith.constant 0 : i32
    return %c0_i32, %c0_i32_0 : i32, i32
  }
  func.func @transform_11(%arg0: i32) -> (i32, i32, i32) {
    %c0_i32 = arith.constant 0 : i32
    %c0_i32_0 = arith.constant 0 : i32
    %c0_i32_1 = arith.constant 0 : i32
    %c0_i32_2 = arith.constant 0 : i32
    return %c0_i32, %c0_i32_0, %c0_i32_1 : i32, i32, i32
  }
  func.func @transform_12(%arg0: i32) -> (i32, i32, i32) {
    %c0_i32 = arith.constant 0 : i32
    %c0_i32_0 = arith.constant 0 : i32
    %c0_i32_1 = arith.constant 0 : i32
    return %arg0, %c0_i32, %c0_i32_0 : i32, i32, i32
  }
}

module attributes {stable_mosaic.version = 11 : i64} {
  func.func @_proj_kernel(%arg0: i32, %arg1: memref<8x128xf32, #tpu.memory_space<vmem>>, %arg2: memref<128x512xbf16, #tpu.memory_space<vmem>>, %arg3: memref<1x512xf32, #tpu.memory_space<vmem>>, %arg4: memref<8x512xf32, #tpu.memory_space<vmem>>) attributes {dimension_semantics = [#tpu.dimension_semantics<parallel>], iteration_bounds = array<i64: 2>, scalar_prefetch = 0 : i64, scratch_operands = 0 : i64, tpu.core_type = #tpu.core_type<tc>, window_params = [{pipeline_mode = #tpu.pipeline_mode<synchronous>, transform_indices = @transform_0, window_bounds = array<i64: 8, 128>}, {transform_indices = @transform_1, window_bounds = array<i64: 128, 512>}, {transform_indices = @transform_2, window_bounds = array<i64: 1, 512>}, {transform_indices = @transform_3, window_bounds = array<i64: 8, 512>}]} {
    %c0 = arith.constant 0 : index
    %c0_0 = arith.constant 0 : index
    %0 = vector.load %arg1[%c0, %c0_0] : memref<8x128xf32, #tpu.memory_space<vmem>>, vector<8x128xf32>
    %1 = arith.truncf %0 : vector<8x128xf32> to vector<8x128xbf16>
    %c0_1 = arith.constant 0 : index
    %c0_2 = arith.constant 0 : index
    %2 = vector.load %arg2[%c0_1, %c0_2] : memref<128x512xbf16, #tpu.memory_space<vmem>>, vector<128x512xbf16>
    %cst = arith.constant dense<0.000000e+00> : vector<8x512xf32>
    %3 = tpu.matmul %1, %2, %cst {dimension_numbers = #tpu.dot_dimension_numbers<[1], [0], [0], [1], [0, 0, 1, 1], [], []>} : vector<8x128xbf16>, vector<128x512xbf16>, vector<8x512xf32> -> vector<8x512xf32>
    %c0_3 = arith.constant 0 : index
    %c0_4 = arith.constant 0 : index
    %4 = vector.load %arg3[%c0_3, %c0_4] : memref<1x512xf32, #tpu.memory_space<vmem>>, vector<1x512xf32>
    %5 = vector.broadcast %4 : vector<1x512xf32> to vector<8x512xf32>
    %6 = arith.addf %3, %5 : vector<8x512xf32>
    %c0_5 = arith.constant 0 : index
    %c0_6 = arith.constant 0 : index
    %7 = vector.load %arg4[%c0_5, %c0_6] : memref<8x512xf32, #tpu.memory_space<vmem>>, vector<8x512xf32>
    tpu.vector_store %arg4[%c0_5, %c0_6], %6 {strides = array<i32>} : memref<8x512xf32, #tpu.memory_space<vmem>>, vector<8x512xf32>,
    return
  }
  func.func @transform_0(%arg0: i32) -> (i32, i32) {
    %c0_i32 = arith.constant 0 : i32
    %c0_i32_0 = arith.constant 0 : i32
    %c0_i32_1 = arith.constant 0 : i32
    return %c0_i32, %c0_i32_0 : i32, i32
  }
  func.func @transform_1(%arg0: i32) -> (i32, i32) {
    %c0_i32 = arith.constant 0 : i32
    %c0_i32_0 = arith.constant 0 : i32
    return %c0_i32, %arg0 : i32, i32
  }
  func.func @transform_2(%arg0: i32) -> (i32, i32) {
    %c0_i32 = arith.constant 0 : i32
    %c0_i32_0 = arith.constant 0 : i32
    return %c0_i32, %arg0 : i32, i32
  }
  func.func @transform_3(%arg0: i32) -> (i32, i32) {
    %c0_i32 = arith.constant 0 : i32
    %c0_i32_0 = arith.constant 0 : i32
    return %c0_i32, %arg0 : i32, i32
  }
}

</mosaic_0001>

<llo_original>
// kernel: bahdanau_decoder_step.3
$region0: #{bahdanau_decoder_step.3}
  #allocation0 [shape = 'u32[]', space=smem, size = 0x4, offset = 0x4, fixed_abs, tag = 'smem constant byte address 0x4 - core index']
  #allocation1 [shape = 'u32[72,128]{1,0:T(1,128)}', space=vmem, size = 0x9000, scoped, tag = 'internal scratch']
  %s0 = inlined_call_operand.vmem [shape: f32[8,128], index: 0, kind: input, shape index: {}]
  %s1 = inlined_call_operand.hbm [shape: bf16[128,1024], index: 1, kind: input, shape index: {}]
  %s2 = inlined_call_operand.vmem [shape: f32[1,1024], index: 2, kind: input, shape index: {}]
  %s3 = inlined_call_operand.vmem [shape: f32[8,1024], index: 3, kind: output, shape index: {}]
  %s4 = sld [smem:[#allocation0]]
  $region49: #{bahdanau_decoder_step.3} parent=0
    _
  %s6 = ssub.s32 1, %s4
  %s7 = scalar_select 0, %s6, %s4
  $region1: #{bahdanau_decoder_step.3} parent=0
    #allocation2 [shape = 'u8[262144]{0}', space=vmem, size = 0x40000, scoped, tag = 'input window, operand 1']
    #allocation3 [shape = 's32[2]{0}', space=sflag, size = 0x8, scoped, tag = 'scoped memory for bahdanau_decoder_step.3']
    %8 = vsyncpa [#allocation3], 0
    %s9 = scalar_lea.sflag [#allocation3], 1
    %10 = vsyncpa %s9, 0
    loop: start=0, step=1, limit=4
    $region2: #{bahdanau_decoder_step.3} parent=1 // loop_pre_header
      _
    $region3: #{bahdanau_decoder_step.3} parent=1 // loop_header
      %s12 = sphi 0, %s16
      %p13 = scmp.ge.s32.totalorder %s12, 4
      %s20 = sphi 0, %s20
      %s22 = sphi 0, %s20
      %s23 = sphi 0, %s22
      %s37 = sphi 0, %s23
      %s43 = sphi 0, %s45
      %s46 = sphi 0, %s43
      %s47 = sphi 0, %s46
      %s63 = sphi 0, %s47
      %s69 = sphi 0, %s71
      %s72 = sphi 0, %s69
      %s73 = sphi 0, %s72
      %s89 = sphi 0, %s73
      %s95 = sphi 0, %s97
      %s98 = sphi 0, %s95
      %s99 = sphi 0, %s98
      %s115 = sphi 0, %s99
    $region4: #{bahdanau_decoder_step.3} parent=1 // loop_header_branch
      %15 = sbr.rel (%p13) target = $region8
    $region5: #{bahdanau_decoder_step.3} parent=1 // loop_body
      %s17 = ssub.s32 %s12, 1
      %s18 = ssub.s32 %s12, 2
      %s19 = sadd.s32 %s12, 1
      %s21 = sadd.s32 %s20, 1
      %p24 = scmp.eq.s32.totalorder %s12, 1
      %p25 = scmp.ne.s32.totalorder %s20, %s22
      %p26 = scmp.eq.s32.totalorder %s12, 0
      %p27 = por %p25, %p26
      %p28 = scmp.ne.s32.totalorder %s20, %s22
      %p29 = scmp.eq.s32.totalorder %s17, 1
      %p30 = por %p28, %p29
      %p31 = scmp.ne.s32.totalorder %s22, %s23
      %p32 = scmp.eq.s32.totalorder %s17, 0
      %p33 = por %p31, %p32
      %p34 = scmp.ne.s32.totalorder %s22, %s23
      %p35 = scmp.eq.s32.totalorder %s18, 1
      %p36 = por %p34, %p35
      %p38 = scmp.ne.s32.totalorder %s23, %s37
      %p39 = scmp.eq.s32.totalorder %s18, 0
      %p40 = por %p38, %p39
      %s41 = ssub.s32 %s12, %s19
      %p42 = scmp.eq.s32.totalorder %s41, 0
      %s44 = sadd.s32 %s43, 1
      %s45 = scalar_select %p42, %s43, %s44
      %p48 = pneg %p42
      %p49 = scmp.eq.s32.totalorder %s12, 1
      %p50 = por %p48, %p49
      %p51 = scmp.ne.s32.totalorder %s43, %s46
      %p52 = scmp.eq.s32.totalorder %s12, 0
      %p53 = por %p51, %p52
      %p54 = scmp.ne.s32.totalorder %s43, %s46
      %p55 = scmp.eq.s32.totalorder %s17, 1
      %p56 = por %p54, %p55
      %p57 = scmp.ne.s32.totalorder %s46, %s47
      %p58 = scmp.eq.s32.totalorder %s17, 0
      %p59 = por %p57, %p58
      %p60 = scmp.ne.s32.totalorder %s46, %s47
      %p61 = scmp.eq.s32.totalorder %s18, 1
      %p62 = por %p60, %p61
      %p64 = scmp.ne.s32.totalorder %s47, %s63
      %p65 = scmp.eq.s32.totalorder %s18, 0
      %p66 = por %p64, %p65
      %s67 = ssub.s32 %s12, %s19
      %p68 = scmp.eq.s32.totalorder %s67, 0
      %s70 = sadd.s32 %s69, 1
      %s71 = scalar_select %p68, %s69, %s70
      %p74 = pneg %p68
      %p75 = scmp.eq.s32.totalorder %s12, 1
      %p76 = por %p74, %p75
      %p77 = scmp.ne.s32.totalorder %s69, %s72
      %p78 = scmp.eq.s32.totalorder %s12, 0
      %p79 = por %p77, %p78
      %p80 = scmp.ne.s32.totalorder %s69, %s72
      %p81 = scmp.eq.s32.totalorder %s17, 1
      %p82 = por %p80, %p81
      %p83 = scmp.ne.s32.totalorder %s72, %s73
      %p84 = scmp.eq.s32.totalorder %s17, 0
      %p85 = por %p83, %p84
      %p86 = scmp.ne.s32.totalorder %s72, %s73
      %p87 = scmp.eq.s32.totalorder %s18, 1
      %p88 = por %p86, %p87
      %p90 = scmp.ne.s32.totalorder %s73, %s89
      %p91 = scmp.eq.s32.totalorder %s18, 0
      %p92 = por %p90, %p91
      %s93 = ssub.s32 %s12, %s19
      %p94 = scmp.eq.s32.totalorder %s93, 0
      %s96 = sadd.s32 %s95, 1
      %s97 = scalar_select %p94, %s95, %s96
      %p100 = pneg %p94
      %p101 = scmp.eq.s32.totalorder %s12, 1
      %p102 = por %p100, %p101
      %p103 = scmp.ne.s32.totalorder %s95, %s98
      %p104 = scmp.eq.s32.totalorder %s12, 0
      %p105 = por %p103, %p104
      %p106 = scmp.ne.s32.totalorder %s95, %s98
      %p107 = scmp.eq.s32.totalorder %s17, 1
      %p108 = por %p106, %p107
      %p109 = scmp.ne.s32.totalorder %s98, %s99
      %p110 = scmp.eq.s32.totalorder %s17, 0
      %p111 = por %p109, %p110
      %p112 = scmp.ne.s32.totalorder %s98, %s99
      %p113 = scmp.eq.s32.totalorder %s18, 1
      %p114 = por %p112, %p113
      %p116 = scmp.ne.s32.totalorder %s99, %s115
      %p117 = scmp.eq.s32.totalorder %s18, 0
      %p118 = por %p116, %p117
      %p119 = scmp.le.s32.totalorder 1, %s12
      %p120 = scmp.lt.s32.totalorder %s12, 3
      %p121 = pnand %p119, %p120
      %p122 = pneg %p121
      // Predicated region
      $region9: #{bahdanau_decoder_step.3} parent=5 // pred_check
        _
      $region10: #{bahdanau_decoder_step.3} parent=5 // pred_check_branch
        %124 = sbr.rel (%p121) target = $region12
      $region11: #{bahdanau_decoder_step.3} parent=5 // pred_region
        %s125 = ssub.s32 %s12, 1
        // Predicated region
        $region13: #{bahdanau_decoder_step.3} parent=11 // pred_check
          %p126 = pneg %p33
        $region14: #{bahdanau_decoder_step.3} parent=11 // pred_check_branch
          %128 = sbr.rel (%p126) target = $region16
        $region15: #{bahdanau_decoder_step.3} parent=11 // pred_region
          _
        $region16: #{bahdanau_decoder_step.3} parent=11 // pred_fallthru
          _
      $region12: #{bahdanau_decoder_step.3} parent=5 // pred_fallthru
        _
      %p129 = scmp.lt.s32.totalorder %s12, 2
      // Predicated region
      $region17: #{bahdanau_decoder_step.3} parent=5 // pred_check
        %p130 = pneg %p129
      $region18: #{bahdanau_decoder_step.3} parent=5 // pred_check_branch
        %132 = sbr.rel (%p130) target = $region20
      $region19: #{bahdanau_decoder_step.3} parent=5 // pred_region
        // Predicated region
        $region21: #{bahdanau_decoder_step.3} parent=19 // pred_check
          %p133 = pneg %p53
        $region22: #{bahdanau_decoder_step.3} parent=19 // pred_check_branch
          %135 = sbr.rel (%p133) target = $region24
        $region23: #{bahdanau_decoder_step.3} parent=19 // pred_region
          %s136 = sand.u32 %s43, 1
          %s137 = scalar_lea.sflag [#allocation3], %s136
          %s138 = sand.u32 %s43, 1
          %s139 = smul.addr %s138, 256
          %s140 = scalar_lea.vmem [#allocation2], %s139
          %s141 = smul.u32 4, %s12
          %143 = vsyncadd %s137, 0
          %s144 = smul.addr %s141, 4
          %s145 = scalar_lea.hbm %s1, %s144
          %s146 = sshll.u32 %s145, 4
          %s147 = int_to_ptr.hbm [resolvable:$true] %s146
          %s148 = sshll.u32 %s140, 4
          %s149 = int_to_ptr.vmem [resolvable:$true] %s148
          %154 = dma.hbm_to_vmem [thread:$0]  %s147, 4096, %s149, %s137, 512, 256, 16
        $region24: #{bahdanau_decoder_step.3} parent=19 // pred_fallthru
          _
        // Predicated region
        $region25: #{bahdanau_decoder_step.3} parent=19 // pred_check
          %p155 = pneg %p79
        $region26: #{bahdanau_decoder_step.3} parent=19 // pred_check_branch
          %157 = sbr.rel (%p155) target = $region28
        $region27: #{bahdanau_decoder_step.3} parent=19 // pred_region
          %s158 = smul.u32 4, %s12
          %p159 = scmp.lt.s32.totalorder %s158, 7
          %s160 = scalar_select %p159, %s158, 7
          %s161 = scalar_lea.vmem %s2, %s160
          %s162 = smul.u32 4, %s12
        $region28: #{bahdanau_decoder_step.3} parent=19 // pred_fallthru
          _
      $region20: #{bahdanau_decoder_step.3} parent=5 // pred_fallthru
        _
      %p163 = scmp.le.s32.totalorder 1, %s12
      %p164 = scmp.lt.s32.totalorder %s12, 3
      %p165 = pnand %p163, %p164
      %p166 = pneg %p165
      // Predicated region
      $region29: #{bahdanau_decoder_step.3} parent=5 // pred_check
        _
      $region30: #{bahdanau_decoder_step.3} parent=5 // pred_check_branch
        %168 = sbr.rel (%p165) target = $region32
      $region31: #{bahdanau_decoder_step.3} parent=5 // pred_region
        %s169 = ssub.s32 %s12, 1
        %s170 = sand.u32 %s46, 1
        %s171 = scalar_lea.sflag [#allocation3], %s170
        %s172 = sand.u32 %s46, 1
        %s173 = smul.addr %s172, 256
        %s174 = scalar_lea.vmem [#allocation2], %s173
        // Predicated region
        $region33: #{bahdanau_decoder_step.3} parent=31 // pred_check
          %p175 = pneg %p59
        $region34: #{bahdanau_decoder_step.3} parent=31 // pred_check_branch
          %177 = sbr.rel (%p175) target = $region36
        $region35: #{bahdanau_decoder_step.3} parent=31 // pred_region
          %179 = dma.done %s171, 4096
        $region36: #{bahdanau_decoder_step.3} parent=31 // pred_fallthru
          _
        %p180 = pneg %p33
        %p181 = pneg %p30
        %s182 = sand.u32 %s46, 1
        %s183 = scalar_lea.sflag [#allocation3], %s182
        %s184 = sand.u32 %s46, 1
        %s185 = smul.addr %s184, 256
        %s186 = scalar_lea.vmem [#allocation2], %s185
        %p187 = pneg %p59
        %p188 = pneg %p56
        %s189 = smul.u32 4, %s17
        %p190 = scmp.lt.s32.totalorder %s189, 7
        %s191 = scalar_select %p190, %s189, 7
        %s192 = scalar_lea.vmem %s2, %s191
        %p193 = pneg %p85
        %p194 = pneg %p82
        %p195 = pneg %p111
        %p196 = pneg %p108
        %s197 = smul.u32 4, %s17
        %p198 = scmp.lt.s32.totalorder %s197, 7
        %s199 = scalar_select %p198, %s197, 7
        %s200 = smul.addr %s199, 8
        %s201 = scalar_lea.vmem %s3, %s200
        %s202 = smul.u32 4, %s17
        %s203 = smul.u32 4, %s17
        %p204 = scmp.lt.s32.totalorder %s203, 7
        %s205 = scalar_select %p204, %s203, 7
        %s206 = scalar_lea.vmem %s2, %s205
        %s207 = smul.u32 4, %s17
        %s208 = smul.u32 4, %s17
        %p209 = scmp.lt.s32.totalorder %s208, 7
        %s210 = scalar_select %p209, %s208, 7
        %s211 = smul.addr %s210, 8
        %s212 = scalar_lea.vmem %s3, %s211
        %s213 = smul.u32 4, %s17
        %v214 = vld [vmem:[%s0] sm:$0xff]
        %v215 = vpack.c.bf16 %v214, %v214
        %v216 = vld [vmem:[%s174] sm:$0xff]
        %v217 = vld [vmem:[%s174 + $0x8] sm:$0xff]
        %v218 = vld [vmem:[%s174 + $0x10] sm:$0xff]
        %v219 = vld [vmem:[%s174 + $0x18] sm:$0xff]
        %v220 = vld [vmem:[%s174 + $0x20] sm:$0xff]
        %v221 = vld [vmem:[%s174 + $0x28] sm:$0xff]
        %v222 = vld [vmem:[%s174 + $0x30] sm:$0xff]
        %v223 = vld [vmem:[%s174 + $0x38] sm:$0xff]
        %v224 = vld [vmem:[%s174 + $0x40] sm:$0xff]
        %v225 = vld [vmem:[%s174 + $0x48] sm:$0xff]
        %v226 = vld [vmem:[%s174 + $0x50] sm:$0xff]
        %v227 = vld [vmem:[%s174 + $0x58] sm:$0xff]
        %v228 = vld [vmem:[%s174 + $0x60] sm:$0xff]
        %v229 = vld [vmem:[%s174 + $0x68] sm:$0xff]
        %v230 = vld [vmem:[%s174 + $0x70] sm:$0xff]
        %v231 = vld [vmem:[%s174 + $0x78] sm:$0xff]
        %v232 = vld [vmem:[%s174 + $0x80] sm:$0xff]
        %v233 = vld [vmem:[%s174 + $0x88] sm:$0xff]
        %v234 = vld [vmem:[%s174 + $0x90] sm:$0xff]
        %v235 = vld [vmem:[%s174 + $0x98] sm:$0xff]
        %v236 = vld [vmem:[%s174 + $0xa0] sm:$0xff]
        %v237 = vld [vmem:[%s174 + $0xa8] sm:$0xff]
        %v238 = vld [vmem:[%s174 + $0xb0] sm:$0xff]
        %v239 = vld [vmem:[%s174 + $0xb8] sm:$0xff]
        %v240 = vld [vmem:[%s174 + $0xc0] sm:$0xff]
        %v241 = vld [vmem:[%s174 + $0xc8] sm:$0xff]
        %v242 = vld [vmem:[%s174 + $0xd0] sm:$0xff]
        %v243 = vld [vmem:[%s174 + $0xd8] sm:$0xff]
        %v244 = vld [vmem:[%s174 + $0xe0] sm:$0xff]
        %v245 = vld [vmem:[%s174 + $0xe8] sm:$0xff]
        %v246 = vld [vmem:[%s174 + $0xf0] sm:$0xff]
        %v247 = vld [vmem:[%s174 + $0xf8] sm:$0xff]
        %v248 = vld [vmem:[%s206] sm:$0xf]
        %v250 = vperm.slane %v248, 0
        %v251 = vperm.slane %v248, 1
        %v252 = vperm.slane %v248, 2
        %v253 = vperm.slane %v248, 3
        %v290 = vunpack.c.l.b16 %v216
        %v291 = vunpack.c.h.b16 %v216
        %v292 = vunpack.c.l.b16 %v217
        %v293 = vunpack.c.h.b16 %v217
        %v294 = vunpack.c.l.b16 %v218
        %v295 = vunpack.c.h.b16 %v218
        %v296 = vunpack.c.l.b16 %v219
        %v297 = vunpack.c.h.b16 %v219
        %v298 = vunpack.c.l.b16 %v220
        %v299 = vunpack.c.h.b16 %v220
        %v300 = vunpack.c.l.b16 %v221
        %v301 = vunpack.c.h.b16 %v221
        %v302 = vunpack.c.l.b16 %v222
        %v303 = vunpack.c.h.b16 %v222
        %v304 = vunpack.c.l.b16 %v223
        %v305 = vunpack.c.h.b16 %v223
        %v306 = vunpack.c.l.b16 %v224
        %v307 = vunpack.c.h.b16 %v224
        %v308 = vunpack.c.l.b16 %v225
        %v309 = vunpack.c.h.b16 %v225
        %v310 = vunpack.c.l.b16 %v226
        %v311 = vunpack.c.h.b16 %v226
        %v312 = vunpack.c.l.b16 %v227
        %v313 = vunpack.c.h.b16 %v227
        %v314 = vunpack.c.l.b16 %v228
        %v315 = vunpack.c.h.b16 %v228
        %v316 = vunpack.c.l.b16 %v229
        %v317 = vunpack.c.h.b16 %v229
        %v318 = vunpack.c.l.b16 %v230
        %v319 = vunpack.c.h.b16 %v230
        %v320 = vunpack.c.l.b16 %v231
        %v321 = vunpack.c.h.b16 %v231
        %v322 = vunpack.c.l.b16 %v232
        %v323 = vunpack.c.h.b16 %v232
        %v324 = vunpack.c.l.b16 %v233
        %v325 = vunpack.c.h.b16 %v233
        %v326 = vunpack.c.l.b16 %v234
        %v327 = vunpack.c.h.b16 %v234
        %v328 = vunpack.c.l.b16 %v235
        %v329 = vunpack.c.h.b16 %v235
        %v330 = vunpack.c.l.b16 %v236
        %v331 = vunpack.c.h.b16 %v236
        %v332 = vunpack.c.l.b16 %v237
        %v333 = vunpack.c.h.b16 %v237
        %v334 = vunpack.c.l.b16 %v238
        %v335 = vunpack.c.h.b16 %v238
        %v336 = vunpack.c.l.b16 %v239
        %v337 = vunpack.c.h.b16 %v239
        %v338 = vunpack.c.l.b16 %v240
        %v339 = vunpack.c.h.b16 %v240
        %v340 = vunpack.c.l.b16 %v241
        %v341 = vunpack.c.h.b16 %v241
        %v342 = vunpack.c.l.b16 %v242
        %v343 = vunpack.c.h.b16 %v242
        %v344 = vunpack.c.l.b16 %v243
        %v345 = vunpack.c.h.b16 %v243
        %v346 = vunpack.c.l.b16 %v244
        %v347 = vunpack.c.h.b16 %v244
        %v348 = vunpack.c.l.b16 %v245
        %v349 = vunpack.c.h.b16 %v245
        %v350 = vunpack.c.l.b16 %v246
        %v351 = vunpack.c.h.b16 %v246
        %v352 = vunpack.c.l.b16 %v247
        %v353 = vunpack.c.h.b16 %v247
        %v354 = vpack.c.b16 %v294, %v290
        %v355 = vpack.c.b16 %v295, %v291
        %v356 = vpack.c.b16 %v296, %v292
        %v357 = vpack.c.b16 %v297, %v293
        %v358 = vpack.c.b16 %v302, %v298
        %v359 = vpack.c.b16 %v303, %v299
        %v360 = vpack.c.b16 %v304, %v300
        %v361 = vpack.c.b16 %v305, %v301
        %v362 = vpack.c.b16 %v310, %v306
        %v363 = vpack.c.b16 %v311, %v307
        %v364 = vpack.c.b16 %v312, %v308
        %v365 = vpack.c.b16 %v313, %v309
        %v366 = vpack.c.b16 %v318, %v314
        %v367 = vpack.c.b16 %v319, %v315
        %v368 = vpack.c.b16 %v320, %v316
        %v369 = vpack.c.b16 %v321, %v317
        %v370 = vpack.c.b16 %v326, %v322
        %v371 = vpack.c.b16 %v327, %v323
        %v372 = vpack.c.b16 %v328, %v324
        %v373 = vpack.c.b16 %v329, %v325
        %v374 = vpack.c.b16 %v334, %v330
        %v375 = vpack.c.b16 %v335, %v331
        %v376 = vpack.c.b16 %v336, %v332
        %v377 = vpack.c.b16 %v337, %v333
        %v378 = vpack.c.b16 %v342, %v338
        %v379 = vpack.c.b16 %v343, %v339
        %v380 = vpack.c.b16 %v344, %v340
        %v381 = vpack.c.b16 %v345, %v341
        %v382 = vpack.c.b16 %v350, %v346
        %v383 = vpack.c.b16 %v351, %v347
        %v384 = vpack.c.b16 %v352, %v348
        %v385 = vpack.c.b16 %v353, %v349
        %418 = vmatpush.bf16.msra.mxu0 %v382
        %419 = vmatpush.bf16.msra.mxu0 %v378
        %420 = vmatpush.bf16.msra.mxu0 %v374
        %421 = vmatpush.bf16.msra.mxu0 %v370
        %422 = vmatpush.bf16.msra.mxu0 %v366
        %423 = vmatpush.bf16.msra.mxu0 %v362
        %424 = vmatpush.bf16.msra.mxu0 %v358
        %425 = vmatpush.bf16.msra.mxu0 %v354
        %426 = vmatmul.bf16.gmra.mxu0 %v215
        %v427 = vpop.f32.mrf.mxu0
        %v428 = vadd.f32 %v250, %v427
        %v429 = vpop.f32.mrf.mxu0
        %430 = vdwg.mxu0
        %431 = vmatpush.bf16.msra.mxu0 %v383
        %432 = vmatpush.bf16.msra.mxu0 %v379
        %433 = vmatpush.bf16.msra.mxu0 %v375
        %434 = vmatpush.bf16.msra.mxu0 %v371
        %435 = vmatpush.bf16.msra.mxu0 %v367
        %436 = vmatpush.bf16.msra.mxu0 %v363
        %437 = vmatpush.bf16.msra.mxu0 %v359
        %438 = vmatpush.bf16.msra.mxu0 %v355
        %439 = vmatmul.bf16.gmra.mxu0 %v215
        %v440 = vpop.f32.mrf.mxu0
        %v441 = vadd.f32 %v251, %v440
        %v442 = vpop.f32.mrf.mxu0
        %443 = vdwg.mxu0
        %444 = vmatpush.bf16.msra.mxu0 %v384
        %445 = vmatpush.bf16.msra.mxu0 %v380
        %446 = vmatpush.bf16.msra.mxu0 %v376
        %447 = vmatpush.bf16.msra.mxu0 %v372
        %448 = vmatpush.bf16.msra.mxu0 %v368
        %449 = vmatpush.bf16.msra.mxu0 %v364
        %450 = vmatpush.bf16.msra.mxu0 %v360
        %451 = vmatpush.bf16.msra.mxu0 %v356
        %452 = vmatmul.bf16.gmra.mxu0 %v215
        %v453 = vpop.f32.mrf.mxu0
        %v454 = vadd.f32 %v252, %v453
        %v455 = vpop.f32.mrf.mxu0
        %456 = vdwg.mxu0
        %457 = vmatpush.bf16.msra.mxu0 %v385
        %458 = vmatpush.bf16.msra.mxu0 %v381
        %459 = vmatpush.bf16.msra.mxu0 %v377
        %460 = vmatpush.bf16.msra.mxu0 %v373
        %461 = vmatpush.bf16.msra.mxu0 %v369
        %462 = vmatpush.bf16.msra.mxu0 %v365
        %463 = vmatpush.bf16.msra.mxu0 %v361
        %464 = vmatpush.bf16.msra.mxu0 %v357
        %465 = vmatmul.bf16.gmra.mxu0 %v215
        %v466 = vpop.f32.mrf.mxu0
        %v467 = vadd.f32 %v253, %v466
        %v468 = vpop.f32.mrf.mxu0
        %469 = vdwg.mxu0
        %470 = vst [vmem:[%s212] sm:$0xff] %v428
        %471 = vst [vmem:[%s212 + $0x8] sm:$0xff] %v441
        %472 = vst [vmem:[%s212 + $0x10] sm:$0xff] %v454
        %473 = vst [vmem:[%s212 + $0x18] sm:$0xff] %v467
        %s474 = smul.u32 4, %s17
        %p475 = scmp.lt.s32.totalorder %s474, 7
        %s476 = scalar_select %p475, %s474, 7
        %s477 = smul.addr %s476, 8
        %s478 = scalar_lea.vmem %s3, %s477
        // Predicated region
        $region37: #{bahdanau_decoder_step.3} parent=31 // pred_check
          %p479 = pneg %p108
        $region38: #{bahdanau_decoder_step.3} parent=31 // pred_check_branch
          %481 = sbr.rel (%p479) target = $region40
        $region39: #{bahdanau_decoder_step.3} parent=31 // pred_region
          %s482 = smul.u32 4, %s17
        $region40: #{bahdanau_decoder_step.3} parent=31 // pred_fallthru
          _
      $region32: #{bahdanau_decoder_step.3} parent=5 // pred_fallthru
        _
      %p483 = scmp.le.s32.totalorder 2, %s12
      // Predicated region
      $region41: #{bahdanau_decoder_step.3} parent=5 // pred_check
        %p484 = pneg %p483
      $region42: #{bahdanau_decoder_step.3} parent=5 // pred_check_branch
        %486 = sbr.rel (%p484) target = $region44
      $region43: #{bahdanau_decoder_step.3} parent=5 // pred_region
        %s487 = ssub.s32 %s12, 2
        // Predicated region
        $region45: #{bahdanau_decoder_step.3} parent=43 // pred_check
          %p488 = pneg %p114
        $region46: #{bahdanau_decoder_step.3} parent=43 // pred_check_branch
          %490 = sbr.rel (%p488) target = $region48
        $region47: #{bahdanau_decoder_step.3} parent=43 // pred_region
          %s491 = smul.u32 4, %s18
          %p492 = scmp.lt.s32.totalorder %s491, 7
          %s493 = scalar_select %p492, %s491, 7
          %s494 = smul.addr %s493, 8
          %s495 = scalar_lea.vmem %s3, %s494
        $region48: #{bahdanau_decoder_step.3} parent=43 // pred_fallthru
          _
      $region44: #{bahdanau_decoder_step.3} parent=5 // pred_fallthru
        _
    $region6: #{bahdanau_decoder_step.3} parent=1 // loop_footer
      %s16 = sadd.s32 1, %s12
    $region7: #{bahdanau_decoder_step.3} parent=1 // loop_footer_branch
      %11 = sbr.rel target = $region3
    $region8: #{bahdanau_decoder_step.3} parent=1 // loop_exit
      _
    %496 = vsyncpa [#allocation3], 1
    %s497 = scalar_lea.sflag [#allocation3], 1
    %498 = vsyncpa %s497, 1

// kernel: bahdanau_decoder_step.2
$region0: #{bahdanau_decoder_step.2}
  #allocation0 [shape = 'u32[]', space=smem, size = 0x4, offset = 0x4, fixed_abs, tag = 'smem constant byte address 0x4 - core index']
  #allocation1 [shape = 'u32[72,128]{1,0:T(1,128)}', space=vmem, size = 0x9000, scoped, tag = 'internal scratch']
  #allocation2 [shape = 'f32[8,128]{1,0:T(8,128)}', space=vmem, size = 0x1000, scoped, tag = 'scratch operand']
  #allocation3 [shape = 'f32[8,128]{1,0:T(8,128)}', space=vmem, size = 0x1000, scoped, tag = 'scratch operand']
  #allocation4 [shape = 'f32[8,128]{1,0:T(8,128)}', space=vmem, size = 0x1000, scoped, tag = 'scratch operand']
  #allocation5 [shape = 'f32[8,128]{1,0:T(8,128)}', space=vmem, size = 0x1000, scoped, tag = 'scratch operand']
  %s0 = inlined_call_operand.vmem [shape: bf16[24,8,128], index: 0, kind: input, shape index: {}]
  %s1 = inlined_call_operand.vmem [shape: f32[24,8,1], index: 1, kind: input, shape index: {}]
  %s2 = inlined_call_operand.vmem [shape: f32[8,128], index: 2, kind: input, shape index: {}]
  %s3 = inlined_call_operand.vmem [shape: f32[2,8,128], index: 3, kind: input, shape index: {}, may-alias: {3,11}]
  %s4 = inlined_call_operand.vmem [shape: bf16[128,128], index: 4, kind: input, shape index: {}]
  %s5 = inlined_call_operand.vmem [shape: f32[1,128], index: 5, kind: input, shape index: {}]
  %s6 = inlined_call_operand.vmem [shape: bf16[128,128], index: 6, kind: input, shape index: {}]
  %s7 = inlined_call_operand.vmem [shape: f32[1,128], index: 7, kind: input, shape index: {}]
  %s8 = inlined_call_operand.vmem [shape: bf16[128,128], index: 8, kind: input, shape index: {}]
  %s9 = inlined_call_operand.vmem [shape: bf16[384,512], index: 9, kind: input, shape index: {}]
  %s10 = inlined_call_operand.vmem [shape: f32[1,512], index: 10, kind: input, shape index: {}]
  %s11 = inlined_call_operand.vmem [shape: f32[2,8,128], index: 11, kind: output, shape index: {0}, may-alias: {3,11}]
  %s12 = inlined_call_operand.vmem [shape: f32[24,8,1], index: 12, kind: output, shape index: {1}]
  %13 = xla_tuple %s11, %s12
  %s14 = sld [smem:[#allocation0]]
  $region93: #{bahdanau_decoder_step.2} parent=0
    _
  %s16 = ssub.s32 1, %s14
  %s17 = scalar_select 0, %s16, %s14
  loop: start=0, step=1, limit=5
  $region2: #{bahdanau_decoder_step.2} parent=0 // loop_pre_header
    _
  $region3: #{bahdanau_decoder_step.2} parent=0 // loop_header
    %s19 = sphi 0, %s23
    %p20 = scmp.ge.s32.totalorder %s19, 5
    %s29 = sphi 0, %s31
    %s32 = sphi 0, %s29
    %s33 = sphi 0, %s32
    %s49 = sphi 0, %s33
    %s55 = sphi 0, %s57
    %s58 = sphi 0, %s55
    %s59 = sphi 0, %s58
    %s75 = sphi 0, %s59
    %s79 = sphi 0, %s79
    %s81 = sphi 0, %s79
    %s82 = sphi 0, %s81
    %s96 = sphi 0, %s82
    %s100 = sphi 0, %s100
    %s102 = sphi 0, %s100
    %s103 = sphi 0, %s102
    %s117 = sphi 0, %s103
    %s121 = sphi 0, %s121
    %s123 = sphi 0, %s121
    %s124 = sphi 0, %s123
    %s138 = sphi 0, %s124
    %s142 = sphi 0, %s142
    %s144 = sphi 0, %s142
    %s145 = sphi 0, %s144
    %s159 = sphi 0, %s145
    %s163 = sphi 0, %s163
    %s165 = sphi 0, %s163
    %s166 = sphi 0, %s165
    %s180 = sphi 0, %s166
    %s184 = sphi 0, %s184
    %s186 = sphi 0, %s184
    %s187 = sphi 0, %s186
    %s201 = sphi 0, %s187
    %s205 = sphi 0, %s205
    %s207 = sphi 0, %s205
    %s208 = sphi 0, %s207
    %s222 = sphi 0, %s208
    %s226 = sphi 0, %s226
    %s228 = sphi 0, %s226
    %s229 = sphi 0, %s228
    %s243 = sphi 0, %s229
    %s247 = sphi 0, %s247
    %s249 = sphi 0, %s247
    %s250 = sphi 0, %s249
    %s264 = sphi 0, %s250
    %s268 = sphi 0, %s268
    %s270 = sphi 0, %s268
    %s271 = sphi 0, %s270
    %s285 = sphi 0, %s271
    %s291 = sphi 0, %s293
    %s294 = sphi 0, %s291
    %s295 = sphi 0, %s294
    %s311 = sphi 0, %s295
  $region4: #{bahdanau_decoder_step.2} parent=0 // loop_header_branch
    %22 = sbr.rel (%p20) target = $region8
  $region5: #{bahdanau_decoder_step.2} parent=0 // loop_body
    %s24 = ssub.s32 %s19, 1
    %s25 = ssub.s32 %s19, 2
    %s26 = sadd.s32 %s19, 1
    %s27 = ssub.s32 %s19, %s26
    %p28 = scmp.eq.s32.totalorder %s27, 0
    %s30 = sadd.s32 %s29, 1
    %s31 = scalar_select %p28, %s29, %s30
    %p34 = pneg %p28
    %p35 = scmp.eq.s32.totalorder %s19, 2
    %p36 = por %p34, %p35
    %p37 = scmp.ne.s32.totalorder %s29, %s32
    %p38 = scmp.eq.s32.totalorder %s19, 0
    %p39 = por %p37, %p38
    %p40 = scmp.ne.s32.totalorder %s29, %s32
    %p41 = scmp.eq.s32.totalorder %s24, 2
    %p42 = por %p40, %p41
    %p43 = scmp.ne.s32.totalorder %s32, %s33
    %p44 = scmp.eq.s32.totalorder %s24, 0
    %p45 = por %p43, %p44
    %p46 = scmp.ne.s32.totalorder %s32, %s33
    %p47 = scmp.eq.s32.totalorder %s25, 2
    %p48 = por %p46, %p47
    %p50 = scmp.ne.s32.totalorder %s33, %s49
    %p51 = scmp.eq.s32.totalorder %s25, 0
    %p52 = por %p50, %p51
    %s53 = ssub.s32 %s19, %s26
    %p54 = scmp.eq.s32.totalorder %s53, 0
    %s56 = sadd.s32 %s55, 1
    %s57 = scalar_select %p54, %s55, %s56
    %p60 = pneg %p54
    %p61 = scmp.eq.s32.totalorder %s19, 2
    %p62 = por %p60, %p61
    %p63 = scmp.ne.s32.totalorder %s55, %s58
    %p64 = scmp.eq.s32.totalorder %s19, 0
    %p65 = por %p63, %p64
    %p66 = scmp.ne.s32.totalorder %s55, %s58
    %p67 = scmp.eq.s32.totalorder %s24, 2
    %p68 = por %p66, %p67
    %p69 = scmp.ne.s32.totalorder %s58, %s59
    %p70 = scmp.eq.s32.totalorder %s24, 0
    %p71 = por %p69, %p70
    %p72 = scmp.ne.s32.totalorder %s58, %s59
    %p73 = scmp.eq.s32.totalorder %s25, 2
    %p74 = por %p72, %p73
    %p76 = scmp.ne.s32.totalorder %s59, %s75
    %p77 = scmp.eq.s32.totalorder %s25, 0
    %p78 = por %p76, %p77
    %s80 = sadd.s32 %s79, 1
    %p83 = scmp.eq.s32.totalorder %s19, 2
    %p84 = scmp.ne.s32.totalorder %s79, %s81
    %p85 = scmp.eq.s32.totalorder %s19, 0
    %p86 = por %p84, %p85
    %p87 = scmp.ne.s32.totalorder %s79, %s81
    %p88 = scmp.eq.s32.totalorder %s24, 2
    %p89 = por %p87, %p88
    %p90 = scmp.ne.s32.totalorder %s81, %s82
    %p91 = scmp.eq.s32.totalorder %s24, 0
    %p92 = por %p90, %p91
    %p93 = scmp.ne.s32.totalorder %s81, %s82
    %p94 = scmp.eq.s32.totalorder %s25, 2
    %p95 = por %p93, %p94
    %p97 = scmp.ne.s32.totalorder %s82, %s96
    %p98 = scmp.eq.s32.totalorder %s25, 0
    %p99 = por %p97, %p98
    %s101 = sadd.s32 %s100, 1
    %p104 = scmp.eq.s32.totalorder %s19, 2
    %p105 = scmp.ne.s32.totalorder %s100, %s102
    %p106 = scmp.eq.s32.totalorder %s19, 0
    %p107 = por %p105, %p106
    %p108 = scmp.ne.s32.totalorder %s100, %s102
    %p109 = scmp.eq.s32.totalorder %s24, 2
    %p110 = por %p108, %p109
    %p111 = scmp.ne.s32.totalorder %s102, %s103
    %p112 = scmp.eq.s32.totalorder %s24, 0
    %p113 = por %p111, %p112
    %p114 = scmp.ne.s32.totalorder %s102, %s103
    %p115 = scmp.eq.s32.totalorder %s25, 2
    %p116 = por %p114, %p115
    %p118 = scmp.ne.s32.totalorder %s103, %s117
    %p119 = scmp.eq.s32.totalorder %s25, 0
    %p120 = por %p118, %p119
    %s122 = sadd.s32 %s121, 1
    %p125 = scmp.eq.s32.totalorder %s19, 2
    %p126 = scmp.ne.s32.totalorder %s121, %s123
    %p127 = scmp.eq.s32.totalorder %s19, 0
    %p128 = por %p126, %p127
    %p129 = scmp.ne.s32.totalorder %s121, %s123
    %p130 = scmp.eq.s32.totalorder %s24, 2
    %p131 = por %p129, %p130
    %p132 = scmp.ne.s32.totalorder %s123, %s124
    %p133 = scmp.eq.s32.totalorder %s24, 0
    %p134 = por %p132, %p133
    %p135 = scmp.ne.s32.totalorder %s123, %s124
    %p136 = scmp.eq.s32.totalorder %s25, 2
    %p137 = por %p135, %p136
    %p139 = scmp.ne.s32.totalorder %s124, %s138
    %p140 = scmp.eq.s32.totalorder %s25, 0
    %p141 = por %p139, %p140
    %s143 = sadd.s32 %s142, 1
    %p146 = scmp.eq.s32.totalorder %s19, 2
    %p147 = scmp.ne.s32.totalorder %s142, %s144
    %p148 = scmp.eq.s32.totalorder %s19, 0
    %p149 = por %p147, %p148
    %p150 = scmp.ne.s32.totalorder %s142, %s144
    %p151 = scmp.eq.s32.totalorder %s24, 2
    %p152 = por %p150, %p151
    %p153 = scmp.ne.s32.totalorder %s144, %s145
    %p154 = scmp.eq.s32.totalorder %s24, 0
    %p155 = por %p153, %p154
    %p156 = scmp.ne.s32.totalorder %s144, %s145
    %p157 = scmp.eq.s32.totalorder %s25, 2
    %p158 = por %p156, %p157
    %p160 = scmp.ne.s32.totalorder %s145, %s159
    %p161 = scmp.eq.s32.totalorder %s25, 0
    %p162 = por %p160, %p161
    %s164 = sadd.s32 %s163, 1
    %p167 = scmp.eq.s32.totalorder %s19, 2
    %p168 = scmp.ne.s32.totalorder %s163, %s165
    %p169 = scmp.eq.s32.totalorder %s19, 0
    %p170 = por %p168, %p169
    %p171 = scmp.ne.s32.totalorder %s163, %s165
    %p172 = scmp.eq.s32.totalorder %s24, 2
    %p173 = por %p171, %p172
    %p174 = scmp.ne.s32.totalorder %s165, %s166
    %p175 = scmp.eq.s32.totalorder %s24, 0
    %p176 = por %p174, %p175
    %p177 = scmp.ne.s32.totalorder %s165, %s166
    %p178 = scmp.eq.s32.totalorder %s25, 2
    %p179 = por %p177, %p178
    %p181 = scmp.ne.s32.totalorder %s166, %s180
    %p182 = scmp.eq.s32.totalorder %s25, 0
    %p183 = por %p181, %p182
    %s185 = sadd.s32 %s184, 1
    %p188 = scmp.eq.s32.totalorder %s19, 2
    %p189 = scmp.ne.s32.totalorder %s184, %s186
    %p190 = scmp.eq.s32.totalorder %s19, 0
    %p191 = por %p189, %p190
    %p192 = scmp.ne.s32.totalorder %s184, %s186
    %p193 = scmp.eq.s32.totalorder %s24, 2
    %p194 = por %p192, %p193
    %p195 = scmp.ne.s32.totalorder %s186, %s187
    %p196 = scmp.eq.s32.totalorder %s24, 0
    %p197 = por %p195, %p196
    %p198 = scmp.ne.s32.totalorder %s186, %s187
    %p199 = scmp.eq.s32.totalorder %s25, 2
    %p200 = por %p198, %p199
    %p202 = scmp.ne.s32.totalorder %s187, %s201
    %p203 = scmp.eq.s32.totalorder %s25, 0
    %p204 = por %p202, %p203
    %s206 = sadd.s32 %s205, 1
    %p209 = scmp.eq.s32.totalorder %s19, 2
    %p210 = scmp.ne.s32.totalorder %s205, %s207
    %p211 = scmp.eq.s32.totalorder %s19, 0
    %p212 = por %p210, %p211
    %p213 = scmp.ne.s32.totalorder %s205, %s207
    %p214 = scmp.eq.s32.totalorder %s24, 2
    %p215 = por %p213, %p214
    %p216 = scmp.ne.s32.totalorder %s207, %s208
    %p217 = scmp.eq.s32.totalorder %s24, 0
    %p218 = por %p216, %p217
    %p219 = scmp.ne.s32.totalorder %s207, %s208
    %p220 = scmp.eq.s32.totalorder %s25, 2
    %p221 = por %p219, %p220
    %p223 = scmp.ne.s32.totalorder %s208, %s222
    %p224 = scmp.eq.s32.totalorder %s25, 0
    %p225 = por %p223, %p224
    %s227 = sadd.s32 %s226, 1
    %p230 = scmp.eq.s32.totalorder %s19, 2
    %p231 = scmp.ne.s32.totalorder %s226, %s228
    %p232 = scmp.eq.s32.totalorder %s19, 0
    %p233 = por %p231, %p232
    %p234 = scmp.ne.s32.totalorder %s226, %s228
    %p235 = scmp.eq.s32.totalorder %s24, 2
    %p236 = por %p234, %p235
    %p237 = scmp.ne.s32.totalorder %s228, %s229
    %p238 = scmp.eq.s32.totalorder %s24, 0
    %p239 = por %p237, %p238
    %p240 = scmp.ne.s32.totalorder %s228, %s229
    %p241 = scmp.eq.s32.totalorder %s25, 2
    %p242 = por %p240, %p241
    %p244 = scmp.ne.s32.totalorder %s229, %s243
    %p245 = scmp.eq.s32.totalorder %s25, 0
    %p246 = por %p244, %p245
    %s248 = sadd.s32 %s247, 1
    %p251 = scmp.eq.s32.totalorder %s19, 2
    %p252 = scmp.ne.s32.totalorder %s247, %s249
    %p253 = scmp.eq.s32.totalorder %s19, 0
    %p254 = por %p252, %p253
    %p255 = scmp.ne.s32.totalorder %s247, %s249
    %p256 = scmp.eq.s32.totalorder %s24, 2
    %p257 = por %p255, %p256
    %p258 = scmp.ne.s32.totalorder %s249, %s250
    %p259 = scmp.eq.s32.totalorder %s24, 0
    %p260 = por %p258, %p259
    %p261 = scmp.ne.s32.totalorder %s249, %s250
    %p262 = scmp.eq.s32.totalorder %s25, 2
    %p263 = por %p261, %p262
    %p265 = scmp.ne.s32.totalorder %s250, %s264
    %p266 = scmp.eq.s32.totalorder %s25, 0
    %p267 = por %p265, %p266
    %s269 = sadd.s32 %s268, 1
    %p272 = scmp.eq.s32.totalorder %s19, 2
    %p273 = scmp.ne.s32.totalorder %s268, %s270
    %p274 = scmp.eq.s32.totalorder %s19, 0
    %p275 = por %p273, %p274
    %p276 = scmp.ne.s32.totalorder %s268, %s270
    %p277 = scmp.eq.s32.totalorder %s24, 2
    %p278 = por %p276, %p277
    %p279 = scmp.ne.s32.totalorder %s270, %s271
    %p280 = scmp.eq.s32.totalorder %s24, 0
    %p281 = por %p279, %p280
    %p282 = scmp.ne.s32.totalorder %s270, %s271
    %p283 = scmp.eq.s32.totalorder %s25, 2
    %p284 = por %p282, %p283
    %p286 = scmp.ne.s32.totalorder %s271, %s285
    %p287 = scmp.eq.s32.totalorder %s25, 0
    %p288 = por %p286, %p287
    %s289 = ssub.s32 %s19, %s26
    %p290 = scmp.eq.s32.totalorder %s289, 0
    %s292 = sadd.s32 %s291, 1
    %s293 = scalar_select %p290, %s291, %s292
    %p296 = pneg %p290
    %p297 = scmp.eq.s32.totalorder %s19, 2
    %p298 = por %p296, %p297
    %p299 = scmp.ne.s32.totalorder %s291, %s294
    %p300 = scmp.eq.s32.totalorder %s19, 0
    %p301 = por %p299, %p300
    %p302 = scmp.ne.s32.totalorder %s291, %s294
    %p303 = scmp.eq.s32.totalorder %s24, 2
    %p304 = por %p302, %p303
    %p305 = scmp.ne.s32.totalorder %s294, %s295
    %p306 = scmp.eq.s32.totalorder %s24, 0
    %p307 = por %p305, %p306
    %p308 = scmp.ne.s32.totalorder %s294, %s295
    %p309 = scmp.eq.s32.totalorder %s25, 2
    %p310 = por %p308, %p309
    %p312 = scmp.ne.s32.totalorder %s295, %s311
    %p313 = scmp.eq.s32.totalorder %s25, 0
    %p314 = por %p312, %p313
    %p315 = scmp.le.s32.totalorder 1, %s19
    %p316 = scmp.lt.s32.totalorder %s19, 4
    %p317 = pnand %p315, %p316
    %p318 = pneg %p317
    // Predicated region
    $region9: #{bahdanau_decoder_step.2} parent=5 // pred_check
      _
    $region10: #{bahdanau_decoder_step.2} parent=5 // pred_check_branch
      %320 = sbr.rel (%p317) target = $region12
    $region11: #{bahdanau_decoder_step.2} parent=5 // pred_region
      %s321 = ssub.s32 %s19, 1
      // Predicated region
      $region13: #{bahdanau_decoder_step.2} parent=11 // pred_check
        %p322 = pneg %p92
      $region14: #{bahdanau_decoder_step.2} parent=11 // pred_check_branch
        %324 = sbr.rel (%p322) target = $region16
      $region15: #{bahdanau_decoder_step.2} parent=11 // pred_region
        _
      $region16: #{bahdanau_decoder_step.2} parent=11 // pred_fallthru
        _
      // Predicated region
      $region17: #{bahdanau_decoder_step.2} parent=11 // pred_check
        %p325 = pneg %p113
      $region18: #{bahdanau_decoder_step.2} parent=11 // pred_check_branch
        %327 = sbr.rel (%p325) target = $region20
      $region19: #{bahdanau_decoder_step.2} parent=11 // pred_region
        _
      $region20: #{bahdanau_decoder_step.2} parent=11 // pred_fallthru
        _
      // Predicated region
      $region21: #{bahdanau_decoder_step.2} parent=11 // pred_check
        %p328 = pneg %p134
      $region22: #{bahdanau_decoder_step.2} parent=11 // pred_check_branch
        %330 = sbr.rel (%p328) target = $region24
      $region23: #{bahdanau_decoder_step.2} parent=11 // pred_region
        _
      $region24: #{bahdanau_decoder_step.2} parent=11 // pred_fallthru
        _
      // Predicated region
      $region25: #{bahdanau_decoder_step.2} parent=11 // pred_check
        %p331 = pneg %p155
      $region26: #{bahdanau_decoder_step.2} parent=11 // pred_check_branch
        %333 = sbr.rel (%p331) target = $region28
      $region27: #{bahdanau_decoder_step.2} parent=11 // pred_region
        _
      $region28: #{bahdanau_decoder_step.2} parent=11 // pred_fallthru
        _
      // Predicated region
      $region29: #{bahdanau_decoder_step.2} parent=11 // pred_check
        %p334 = pneg %p176
      $region30: #{bahdanau_decoder_step.2} parent=11 // pred_check_branch
        %336 = sbr.rel (%p334) target = $region32
      $region31: #{bahdanau_decoder_step.2} parent=11 // pred_region
        _
      $region32: #{bahdanau_decoder_step.2} parent=11 // pred_fallthru
        _
      // Predicated region
      $region33: #{bahdanau_decoder_step.2} parent=11 // pred_check
        %p337 = pneg %p197
      $region34: #{bahdanau_decoder_step.2} parent=11 // pred_check_branch
        %339 = sbr.rel (%p337) target = $region36
      $region35: #{bahdanau_decoder_step.2} parent=11 // pred_region
        _
      $region36: #{bahdanau_decoder_step.2} parent=11 // pred_fallthru
        _
      // Predicated region
      $region37: #{bahdanau_decoder_step.2} parent=11 // pred_check
        %p340 = pneg %p218
      $region38: #{bahdanau_decoder_step.2} parent=11 // pred_check_branch
        %342 = sbr.rel (%p340) target = $region40
      $region39: #{bahdanau_decoder_step.2} parent=11 // pred_region
        _
      $region40: #{bahdanau_decoder_step.2} parent=11 // pred_fallthru
        _
      // Predicated region
      $region41: #{bahdanau_decoder_step.2} parent=11 // pred_check
        %p343 = pneg %p239
      $region42: #{bahdanau_decoder_step.2} parent=11 // pred_check_branch
        %345 = sbr.rel (%p343) target = $region44
      $region43: #{bahdanau_decoder_step.2} parent=11 // pred_region
        _
      $region44: #{bahdanau_decoder_step.2} parent=11 // pred_fallthru
        _
      // Predicated region
      $region45: #{bahdanau_decoder_step.2} parent=11 // pred_check
        %p346 = pneg %p260
      $region46: #{bahdanau_decoder_step.2} parent=11 // pred_check_branch
        %348 = sbr.rel (%p346) target = $region48
      $region47: #{bahdanau_decoder_step.2} parent=11 // pred_region
        _
      $region48: #{bahdanau_decoder_step.2} parent=11 // pred_fallthru
        _
    $region12: #{bahdanau_decoder_step.2} parent=5 // pred_fallthru
      _
    %p349 = scmp.lt.s32.totalorder %s19, 3
    // Predicated region
    $region49: #{bahdanau_decoder_step.2} parent=5 // pred_check
      %p350 = pneg %p349
    $region50: #{bahdanau_decoder_step.2} parent=5 // pred_check_branch
      %352 = sbr.rel (%p350) target = $region52
    $region51: #{bahdanau_decoder_step.2} parent=5 // pred_region
      // Predicated region
      $region53: #{bahdanau_decoder_step.2} parent=51 // pred_check
        %p353 = pneg %p39
      $region54: #{bahdanau_decoder_step.2} parent=51 // pred_check_branch
        %355 = sbr.rel (%p353) target = $region56
      $region55: #{bahdanau_decoder_step.2} parent=51 // pred_region
        %s356 = smul.u32 8, %s19
        %p357 = scmp.lt.s32.totalorder %s356, 23
        %s358 = scalar_select %p357, %s356, 23
        %s359 = smul.addr %s358, 4
        %s360 = scalar_lea.vmem %s0, %s359
        %s361 = smul.u32 8, %s19
      $region56: #{bahdanau_decoder_step.2} parent=51 // pred_fallthru
        _
      // Predicated region
      $region57: #{bahdanau_decoder_step.2} parent=51 // pred_check
        %p362 = pneg %p65
      $region58: #{bahdanau_decoder_step.2} parent=51 // pred_check_branch
        %364 = sbr.rel (%p362) target = $region60
      $region59: #{bahdanau_decoder_step.2} parent=51 // pred_region
        %s365 = smul.u32 8, %s19
        %p366 = scmp.lt.s32.totalorder %s365, 23
        %s367 = scalar_select %p366, %s365, 23
        %s368 = smul.addr %s367, 8
        %s369 = scalar_lea.vmem %s1, %s368
        %s370 = smul.u32 8, %s19
      $region60: #{bahdanau_decoder_step.2} parent=51 // pred_fallthru
        _
    $region52: #{bahdanau_decoder_step.2} parent=5 // pred_fallthru
      _
    %p371 = scmp.le.s32.totalorder 1, %s19
    %p372 = scmp.lt.s32.totalorder %s19, 4
    %p373 = pnand %p371, %p372
    %p374 = pneg %p373
    // Predicated region
    $region61: #{bahdanau_decoder_step.2} parent=5 // pred_check
      _
    $region62: #{bahdanau_decoder_step.2} parent=5 // pred_check_branch
      %376 = sbr.rel (%p373) target = $region64
    $region63: #{bahdanau_decoder_step.2} parent=5 // pred_region
      %s377 = ssub.s32 %s19, 1
      %s378 = smul.u32 8, %s24
      %p379 = scmp.lt.s32.totalorder %s378, 23
      %s380 = scalar_select %p379, %s378, 23
      %s381 = smul.addr %s380, 4
      %s382 = scalar_lea.vmem %s0, %s381
      %p383 = pneg %p45
      %p384 = pneg %p42
      %s385 = smul.u32 8, %s24
      %p386 = scmp.lt.s32.totalorder %s385, 23
      %s387 = scalar_select %p386, %s385, 23
      %s388 = smul.addr %s387, 8
      %s389 = scalar_lea.vmem %s1, %s388
      %p390 = pneg %p71
      %p391 = pneg %p68
      %p392 = pneg %p92
      %p393 = pneg %p89
      %p394 = pneg %p113
      %p395 = pneg %p110
      %p396 = pneg %p134
      %p397 = pneg %p131
      %p398 = pneg %p155
      %p399 = pneg %p152
      %p400 = pneg %p176
      %p401 = pneg %p173
      %p402 = pneg %p197
      %p403 = pneg %p194
      %p404 = pneg %p218
      %p405 = pneg %p215
      %p406 = pneg %p239
      %p407 = pneg %p236
      %p408 = pneg %p260
      %p409 = pneg %p257
      %p410 = pneg %p281
      %p411 = pneg %p278
      %p412 = pneg %p307
      %p413 = pneg %p304
      %s414 = smul.u32 8, %s24
      %p415 = scmp.lt.s32.totalorder %s414, 23
      %s416 = scalar_select %p415, %s414, 23
      %s417 = smul.addr %s416, 8
      %s418 = scalar_lea.vmem %s12, %s417
      %s419 = smul.u32 8, %s24
      %p420 = scmp.lt.s32.totalorder %s419, 23
      %s421 = scalar_select %p420, %s419, 23
      %s422 = smul.addr %s421, 4
      %s423 = scalar_lea.vmem %s0, %s422
      %s424 = smul.u32 8, %s24
      %s425 = smul.u32 8, %s24
      %p426 = scmp.lt.s32.totalorder %s425, 23
      %s427 = scalar_select %p426, %s425, 23
      %s428 = smul.addr %s427, 8
      %s429 = scalar_lea.vmem %s1, %s428
      %s430 = smul.u32 8, %s24
      %s431 = smul.u32 8, %s24
      %p432 = scmp.lt.s32.totalorder %s431, 23
      %s433 = scalar_select %p432, %s431, 23
      %s434 = smul.addr %s433, 8
      %s435 = scalar_lea.vmem %s12, %s434
      %s436 = smul.u32 8, %s24
      %p437 = scmp.eq.s32.totalorder %s24, 0
      // Predicated region
      $region65: #{bahdanau_decoder_step.2} parent=63 // pred_check
        %p438 = pneg %p437
      $region66: #{bahdanau_decoder_step.2} parent=63 // pred_check_branch
        %440 = sbr.rel (%p438) target = $region68
      $region67: #{bahdanau_decoder_step.2} parent=63 // pred_region
        %441 = vst [vmem:[#allocation2] sm:$0xff] -1e+30
        %442 = vst [vmem:[#allocation3] sm:$0xff] 0.0
        %443 = vst [vmem:[#allocation4] sm:$0xff] 0.0
        %v444 = vld [vmem:[%s3] sm:$0xff]
        %v445 = vpack.c.bf16 %v444, %v444
        %v446 = vld [vmem:[%s6] sm:$0xf]
        %v447 = vld [vmem:[%s6 + $0x4] sm:$0xf]
        %v448 = vld [vmem:[%s6 + $0x8] sm:$0xf]
        %v449 = vld [vmem:[%s6 + $0xc] sm:$0xf]
        %v450 = vld [vmem:[%s6 + $0x10] sm:$0xf]
        %v451 = vld [vmem:[%s6 + $0x14] sm:$0xf]
        %v452 = vld [vmem:[%s6 + $0x18] sm:$0xf]
        %v453 = vld [vmem:[%s6 + $0x1c] sm:$0xf]
        %v454 = vld [vmem:[%s6 + $0x20] sm:$0xf]
        %v455 = vld [vmem:[%s6 + $0x24] sm:$0xf]
        %v456 = vld [vmem:[%s6 + $0x28] sm:$0xf]
        %v457 = vld [vmem:[%s6 + $0x2c] sm:$0xf]
        %v458 = vld [vmem:[%s6 + $0x30] sm:$0xf]
        %v459 = vld [vmem:[%s6 + $0x34] sm:$0xf]
        %v460 = vld [vmem:[%s6 + $0x38] sm:$0xf]
        %v461 = vld [vmem:[%s6 + $0x3c] sm:$0xf]
        %v462 = vld [vmem:[%s7] sm:$0x1]
        %v464 = vperm.slane %v462, 0
        %v482 = vunpack.c.l.b16 %v446
        %v483 = vunpack.c.l.b16 %v447
        %v484 = vunpack.c.l.b16 %v448
        %v485 = vunpack.c.l.b16 %v449
        %v486 = vunpack.c.l.b16 %v450
        %v487 = vunpack.c.l.b16 %v451
        %v488 = vunpack.c.l.b16 %v452
        %v489 = vunpack.c.l.b16 %v453
        %v490 = vunpack.c.l.b16 %v454
        %v491 = vunpack.c.l.b16 %v455
        %v492 = vunpack.c.l.b16 %v456
        %v493 = vunpack.c.l.b16 %v457
        %v494 = vunpack.c.l.b16 %v458
        %v495 = vunpack.c.l.b16 %v459
        %v496 = vunpack.c.l.b16 %v460
        %v497 = vunpack.c.l.b16 %v461
        %v498 = vpack.c.b16 %v483, %v482
        %v499 = vpack.c.b16 %v485, %v484
        %v500 = vpack.c.b16 %v487, %v486
        %v501 = vpack.c.b16 %v489, %v488
        %v502 = vpack.c.b16 %v491, %v490
        %v503 = vpack.c.b16 %v493, %v492
        %v504 = vpack.c.b16 %v495, %v494
        %v505 = vpack.c.b16 %v497, %v496
        %514 = vmatpush.bf16.msra.mxu0 %v505
        %515 = vmatpush.bf16.msra.mxu0 %v504
        %516 = vmatpush.bf16.msra.mxu0 %v503
        %517 = vmatpush.bf16.msra.mxu0 %v502
        %518 = vmatpush.bf16.msra.mxu0 %v501
        %519 = vmatpush.bf16.msra.mxu0 %v500
        %520 = vmatpush.bf16.msra.mxu0 %v499
        %521 = vmatpush.bf16.msra.mxu0 %v498
        %522 = vmatmul.bf16.gmra.mxu0 %v445
        %v523 = vpop.f32.mrf.mxu0
        %v524 = vadd.f32 %v464, %v523
        %v525 = vpop.f32.mrf.mxu0
        %526 = vdwg.mxu0
        %527 = vst [vmem:[#allocation5] sm:$0xff] %v524
      $region68: #{bahdanau_decoder_step.2} parent=63 // pred_fallthru
        _
      %v528 = vld [vmem:[%s423] sm:$0xf]
      %v529 = vld [vmem:[%s423 + $0x4] sm:$0xf]
      %v530 = vld [vmem:[%s423 + $0x8] sm:$0xf]
      %v531 = vld [vmem:[%s423 + $0xc] sm:$0xf]
      %v532 = vld [vmem:[%s423 + $0x10] sm:$0xf]
      %v533 = vld [vmem:[%s423 + $0x14] sm:$0xf]
      %v534 = vld [vmem:[%s423 + $0x18] sm:$0xf]
      %v535 = vld [vmem:[%s423 + $0x1c] sm:$0xf]
      %v536 = vld [vmem:[%s4] sm:$0xf]
      %v537 = vld [vmem:[%s4 + $0x4] sm:$0xf]
      %v538 = vld [vmem:[%s4 + $0x8] sm:$0xf]
      %v539 = vld [vmem:[%s4 + $0xc] sm:$0xf]
      %v540 = vld [vmem:[%s4 + $0x10] sm:$0xf]
      %v541 = vld [vmem:[%s4 + $0x14] sm:$0xf]
      %v542 = vld [vmem:[%s4 + $0x18] sm:$0xf]
      %v543 = vld [vmem:[%s4 + $0x1c] sm:$0xf]
      %v544 = vld [vmem:[%s4 + $0x20] sm:$0xf]
      %v545 = vld [vmem:[%s4 + $0x24] sm:$0xf]
      %v546 = vld [vmem:[%s4 + $0x28] sm:$0xf]
      %v547 = vld [vmem:[%s4 + $0x2c] sm:$0xf]
      %v548 = vld [vmem:[%s4 + $0x30] sm:$0xf]
      %v549 = vld [vmem:[%s4 + $0x34] sm:$0xf]
      %v550 = vld [vmem:[%s4 + $0x38] sm:$0xf]
      %v551 = vld [vmem:[%s4 + $0x3c] sm:$0xf]
      %v552 = vld [vmem:[%s5] sm:$0x1]
      %v554 = vperm.slane %v552, 0
      %v564 = vunpack.c.l.b16 %v528
      %v565 = vunpack.c.l.b16 %v529
      %v566 = vunpack.c.l.b16 %v530
      %v567 = vunpack.c.l.b16 %v531
      %v568 = vunpack.c.l.b16 %v532
      %v569 = vunpack.c.l.b16 %v533
      %v570 = vunpack.c.l.b16 %v534
      %v571 = vunpack.c.l.b16 %v535
      %v572 = vpack.c.b16 %v565, %v564
      %v573 = vpack.c.b16 %v567, %v566
      %v574 = vpack.c.b16 %v569, %v568
      %v575 = vpack.c.b16 %v571, %v570
      %v596 = vunpack.c.l.b16 %v536
      %v597 = vunpack.c.l.b16 %v537
      %v598 = vunpack.c.l.b16 %v538
      %v599 = vunpack.c.l.b16 %v539
      %v600 = vunpack.c.l.b16 %v540
      %v601 = vunpack.c.l.b16 %v541
      %v602 = vunpack.c.l.b16 %v542
      %v603 = vunpack.c.l.b16 %v543
      %v604 = vunpack.c.l.b16 %v544
      %v605 = vunpack.c.l.b16 %v545
      %v606 = vunpack.c.l.b16 %v546
      %v607 = vunpack.c.l.b16 %v547
      %v608 = vunpack.c.l.b16 %v548
      %v609 = vunpack.c.l.b16 %v549
      %v610 = vunpack.c.l.b16 %v550
      %v611 = vunpack.c.l.b16 %v551
      %v612 = vpack.c.b16 %v597, %v596
      %v613 = vpack.c.b16 %v599, %v598
      %v614 = vpack.c.b16 %v601, %v600
      %v615 = vpack.c.b16 %v603, %v602
      %v616 = vpack.c.b16 %v605, %v604
      %v617 = vpack.c.b16 %v607, %v606
      %v618 = vpack.c.b16 %v609, %v608
      %v619 = vpack.c.b16 %v611, %v610
      %628 = vmatpush.bf16.msra.mxu0 %v619
      %629 = vmatpush.bf16.msra.mxu0 %v618
      %630 = vmatpush.bf16.msra.mxu0 %v617
      %631 = vmatpush.bf16.msra.mxu0 %v616
      %632 = vmatpush.bf16.msra.mxu0 %v615
      %633 = vmatpush.bf16.msra.mxu0 %v614
      %634 = vmatpush.bf16.msra.mxu0 %v613
      %635 = vmatpush.bf16.msra.mxu0 %v612
      %636 = vmatmul.bf16.gmra.mxu0 %v572
      %v637 = vpop.f32.mrf.mxu0
      %v638 = vadd.f32 %v554, %v637
      %v639 = vpop.f32.mrf.mxu0
      %v640 = vadd.f32 %v554, %v639
      %641 = vmatmul.bf16.gmra.mxu0 %v573
      %v642 = vpop.f32.mrf.mxu0
      %v643 = vadd.f32 %v554, %v642
      %v644 = vpop.f32.mrf.mxu0
      %v645 = vadd.f32 %v554, %v644
      %646 = vmatmul.bf16.gmra.mxu0 %v574
      %v647 = vpop.f32.mrf.mxu0
      %v648 = vadd.f32 %v554, %v647
      %v649 = vpop.f32.mrf.mxu0
      %v650 = vadd.f32 %v554, %v649
      %651 = vmatmul.bf16.gmra.mxu0 %v575
      %v652 = vpop.f32.mrf.mxu0
      %v653 = vadd.f32 %v554, %v652
      %v654 = vpop.f32.mrf.mxu0
      %v655 = vadd.f32 %v554, %v654
      %656 = vdwg.mxu0
      %v657 = vld [vmem:[#allocation5] sm:$0xff]
      %v658 = vadd.f32 %v638, %v657
      %v659 = vadd.f32 %v640, %v657
      %v660 = vadd.f32 %v643, %v657
      %v661 = vadd.f32 %v645, %v657
      %v662 = vadd.f32 %v648, %v657
      %v663 = vadd.f32 %v650, %v657
      %v664 = vadd.f32 %v653, %v657
      %v665 = vadd.f32 %v655, %v657
      %v666 = vtanh.pop %v658
      %v667 = vtanh.pop %v659
      %v668 = vtanh.pop %v660
      %v669 = vtanh.pop %v661
      %v670 = vtanh.pop %v662
      %v671 = vtanh.pop %v663
      %v672 = vtanh.pop %v664
      %v673 = vtanh.pop %v665
      %v674 = vpack.c.bf16 %v667, %v666
      %v675 = vpack.c.bf16 %v669, %v668
      %v676 = vpack.c.bf16 %v671, %v670
      %v677 = vpack.c.bf16 %v673, %v672
      %v678 = vld [vmem:[%s8] sm:$0xf]
      %v679 = vld [vmem:[%s8 + $0x4] sm:$0xf]
      %v680 = vld [vmem:[%s8 + $0x8] sm:$0xf]
      %v681 = vld [vmem:[%s8 + $0xc] sm:$0xf]
      %v682 = vld [vmem:[%s8 + $0x10] sm:$0xf]
      %v683 = vld [vmem:[%s8 + $0x14] sm:$0xf]
      %v684 = vld [vmem:[%s8 + $0x18] sm:$0xf]
      %v685 = vld [vmem:[%s8 + $0x1c] sm:$0xf]
      %v686 = vld [vmem:[%s8 + $0x20] sm:$0xf]
      %v687 = vld [vmem:[%s8 + $0x24] sm:$0xf]
      %v688 = vld [vmem:[%s8 + $0x28] sm:$0xf]
      %v689 = vld [vmem:[%s8 + $0x2c] sm:$0xf]
      %v690 = vld [vmem:[%s8 + $0x30] sm:$0xf]
      %v691 = vld [vmem:[%s8 + $0x34] sm:$0xf]
      %v692 = vld [vmem:[%s8 + $0x38] sm:$0xf]
      %v693 = vld [vmem:[%s8 + $0x3c] sm:$0xf]
      %v710 = vunpack.c.l.b16 %v678
      %v711 = vunpack.c.l.b16 %v679
      %v712 = vunpack.c.l.b16 %v680
      %v713 = vunpack.c.l.b16 %v681
      %v714 = vunpack.c.l.b16 %v682
      %v715 = vunpack.c.l.b16 %v683
      %v716 = vunpack.c.l.b16 %v684
      %v717 = vunpack.c.l.b16 %v685
      %v718 = vunpack.c.l.b16 %v686
      %v719 = vunpack.c.l.b16 %v687
      %v720 = vunpack.c.l.b16 %v688
      %v721 = vunpack.c.l.b16 %v689
      %v722 = vunpack.c.l.b16 %v690
      %v723 = vunpack.c.l.b16 %v691
      %v724 = vunpack.c.l.b16 %v692
      %v725 = vunpack.c.l.b16 %v693
      %v726 = vpack.c.b16 %v711, %v710
      %v727 = vpack.c.b16 %v713, %v712
      %v728 = vpack.c.b16 %v715, %v714
      %v729 = vpack.c.b16 %v717, %v716
      %v730 = vpack.c.b16 %v719, %v718
      %v731 = vpack.c.b16 %v721, %v720
      %v732 = vpack.c.b16 %v723, %v722
      %v733 = vpack.c.b16 %v725, %v724
      %742 = vmatpush.bf16.msra.mxu0 %v733
      %743 = vmatpush.bf16.msra.mxu0 %v732
      %744 = vmatpush.bf16.msra.mxu0 %v731
      %745 = vmatpush.bf16.msra.mxu0 %v730
      %746 = vmatpush.bf16.msra.mxu0 %v729
      %747 = vmatpush.bf16.msra.mxu0 %v728
      %748 = vmatpush.bf16.msra.mxu0 %v727
      %749 = vmatpush.bf16.msra.mxu0 %v726
      %750 = vmatmul.bf16.gmra.mxu0 %v674
      %v751 = vpop.f32.mrf.mxu0
      %v752 = vadd.f32 0.0, %v751
      %v753 = vpop.f32.mrf.mxu0
      %v754 = vadd.f32 0.0, %v753
      %755 = vmatmul.bf16.gmra.mxu0 %v675
      %v756 = vpop.f32.mrf.mxu0
      %v757 = vadd.f32 0.0, %v756
      %v758 = vpop.f32.mrf.mxu0
      %v759 = vadd.f32 0.0, %v758
      %760 = vmatmul.bf16.gmra.mxu0 %v676
      %v761 = vpop.f32.mrf.mxu0
      %v762 = vadd.f32 0.0, %v761
      %v763 = vpop.f32.mrf.mxu0
      %v764 = vadd.f32 0.0, %v763
      %765 = vmatmul.bf16.gmra.mxu0 %v677
      %v766 = vpop.f32.mrf.mxu0
      %v767 = vadd.f32 0.0, %v766
      %v768 = vpop.f32.mrf.mxu0
      %v769 = vadd.f32 0.0, %v768
      %770 = vdwg.mxu0
      %v771 = vld [vmem:[%s429] sm:$0xff]
      %v772 = vld [vmem:[%s429 + $0x8] sm:$0xff]
      %v773 = vld [vmem:[%s429 + $0x10] sm:$0xff]
      %v774 = vld [vmem:[%s429 + $0x18] sm:$0xff]
      %v775 = vld [vmem:[%s429 + $0x20] sm:$0xff]
      %v776 = vld [vmem:[%s429 + $0x28] sm:$0xff]
      %v777 = vld [vmem:[%s429 + $0x30] sm:$0xff]
      %v778 = vld [vmem:[%s429 + $0x38] sm:$0xff]
      %780 = vset.pattern.permute.xlu0 0
      %781 = vperm.xlu0 %780, %v771
      %v782 = vpop.permute.xlu0 %781
      %785 = vset.pattern.permute.xlu0 0
      %786 = vperm.xlu0 %785, %v772
      %v787 = vpop.permute.xlu0 %786
      %790 = vset.pattern.permute.xlu0 0
      %791 = vperm.xlu0 %790, %v773
      %v792 = vpop.permute.xlu0 %791
      %795 = vset.pattern.permute.xlu0 0
      %796 = vperm.xlu0 %795, %v774
      %v797 = vpop.permute.xlu0 %796
      %800 = vset.pattern.permute.xlu0 0
      %801 = vperm.xlu0 %800, %v775
      %v802 = vpop.permute.xlu0 %801
      %805 = vset.pattern.permute.xlu0 0
      %806 = vperm.xlu0 %805, %v776
      %v807 = vpop.permute.xlu0 %806
      %810 = vset.pattern.permute.xlu0 0
      %811 = vperm.xlu0 %810, %v777
      %v812 = vpop.permute.xlu0 %811
      %815 = vset.pattern.permute.xlu0 0
      %816 = vperm.xlu0 %815, %v778
      %v817 = vpop.permute.xlu0 %816
      %v819 = vadd.f32 %v752, %v782
      %v820 = vadd.f32 %v754, %v787
      %v821 = vadd.f32 %v757, %v792
      %v822 = vadd.f32 %v759, %v797
      %v823 = vadd.f32 %v762, %v802
      %v824 = vadd.f32 %v764, %v807
      %v825 = vadd.f32 %v767, %v812
      %v826 = vadd.f32 %v769, %v817
      %827 = vmax.xlane.f32.xlu0 %v819
      %v828 = vpop.xlane.xlu0 %827
      %829 = vmax.xlane.f32.xlu0 %v820
      %v830 = vpop.xlane.xlu0 %829
      %831 = vmax.xlane.f32.xlu0 %v821
      %v832 = vpop.xlane.xlu0 %831
      %833 = vmax.xlane.f32.xlu0 %v822
      %v834 = vpop.xlane.xlu0 %833
      %835 = vmax.xlane.f32.xlu0 %v823
      %v836 = vpop.xlane.xlu0 %835
      %837 = vmax.xlane.f32.xlu0 %v824
      %v838 = vpop.xlane.xlu0 %837
      %839 = vmax.xlane.f32.xlu0 %v825
      %v840 = vpop.xlane.xlu0 %839
      %841 = vmax.xlane.f32.xlu0 %v826
      %v842 = vpop.xlane.xlu0 %841
      %vm843 = vcmask 7168
      %844 = vst.msk [vmem:[%s435] sm:$0xff] %vm843, %v828
      %845 = vst.msk [vmem:[%s435 + $0x8] sm:$0xff] %vm843, %v830
      %846 = vst.msk [vmem:[%s435 + $0x10] sm:$0xff] %vm843, %v832
      %847 = vst.msk [vmem:[%s435 + $0x18] sm:$0xff] %vm843, %v834
      %848 = vst.msk [vmem:[%s435 + $0x20] sm:$0xff] %vm843, %v836
      %849 = vst.msk [vmem:[%s435 + $0x28] sm:$0xff] %vm843, %v838
      %850 = vst.msk [vmem:[%s435 + $0x30] sm:$0xff] %vm843, %v840
      %851 = vst.msk [vmem:[%s435 + $0x38] sm:$0xff] %vm843, %v842
      %v852 = vmax.f32 %v819, %v823
      %v853 = vmax.f32 %v820, %v824
      %v854 = vmax.f32 %v821, %v825
      %v855 = vmax.f32 %v822, %v826
      %v856 = vmax.f32 %v852, %v853
      %v857 = vmax.f32 %v854, %v855
      %v858 = vmax.f32 %v856, %v857
      %v859 = vsub.f32 %v819, %v858
      %v860 = vsub.f32 %v820, %v858
      %v861 = vsub.f32 %v821, %v858
      %v862 = vsub.f32 %v822, %v858
      %v863 = vsub.f32 %v823, %v858
      %v864 = vsub.f32 %v824, %v858
      %v865 = vsub.f32 %v825, %v858
      %v866 = vsub.f32 %v826, %v858
      %v867 = vmul.f32 %v859, 1.442695
      %v868 = vpow.pop %v867
      %v869 = vmul.f32 %v860, 1.442695
      %v870 = vpow.pop %v869
      %v871 = vmul.f32 %v861, 1.442695
      %v872 = vpow.pop %v871
      %v873 = vmul.f32 %v862, 1.442695
      %v874 = vpow.pop %v873
      %v875 = vmul.f32 %v863, 1.442695
      %v876 = vpow.pop %v875
      %v877 = vmul.f32 %v864, 1.442695
      %v878 = vpow.pop %v877
      %v879 = vmul.f32 %v865, 1.442695
      %v880 = vpow.pop %v879
      %v881 = vmul.f32 %v866, 1.442695
      %v882 = vpow.pop %v881
      %v883 = vadd.f32 %v868, %v870
      %v884 = vadd.f32 %v883, %v872
      %v885 = vadd.f32 %v884, %v874
      %v886 = vadd.f32 %v885, %v876
      %v887 = vadd.f32 %v886, %v878
      %v888 = vadd.f32 %v887, %v880
      %v889 = vadd.f32 %v888, %v882
      %v890 = vunpack.c.l.bf16 %v528
      %v891 = vunpack.c.l.bf16 %v529
      %v892 = vunpack.c.l.bf16 %v530
      %v893 = vunpack.c.l.bf16 %v531
      %v894 = vunpack.c.l.bf16 %v532
      %v895 = vunpack.c.l.bf16 %v533
      %v896 = vunpack.c.l.bf16 %v534
      %v897 = vunpack.c.l.bf16 %v535
      %v898 = vmul.f32 %v868, %v890
      %v899 = vmul.f32 %v870, %v891
      %v900 = vmul.f32 %v872, %v892
      %v901 = vmul.f32 %v874, %v893
      %v902 = vmul.f32 %v876, %v894
      %v903 = vmul.f32 %v878, %v895
      %v904 = vmul.f32 %v880, %v896
      %v905 = vmul.f32 %v882, %v897
      %v906 = vadd.f32 %v898, %v899
      %v907 = vadd.f32 %v906, %v900
      %v908 = vadd.f32 %v907, %v901
      %v909 = vadd.f32 %v908, %v902
      %v910 = vadd.f32 %v909, %v903
      %v911 = vadd.f32 %v910, %v904
      %v912 = vadd.f32 %v911, %v905
      %v913 = vld [vmem:[#allocation2] sm:$0xff]
      %v914 = vmax.f32 %v913, %v858
      %v915 = vsub.f32 %v913, %v914
      %v916 = vmul.f32 %v915, 1.442695
      %v917 = vpow.pop %v916
      %v918 = vsub.f32 %v858, %v914
      %v919 = vmul.f32 %v918, 1.442695
      %v920 = vpow.pop %v919
      %v921 = vld [vmem:[#allocation3] sm:$0xff]
      %v922 = vmul.f32 %v917, %v921
      %v923 = vmul.f32 %v920, %v889
      %v924 = vadd.f32 %v922, %v923
      %925 = vst [vmem:[#allocation3] sm:$0xff] %v924
      %v926 = vld [vmem:[#allocation4] sm:$0xff]
      %v927 = vmul.f32 %v917, %v926
      %v928 = vmul.f32 %v920, %v912
      %v929 = vadd.f32 %v927, %v928
      %930 = vst [vmem:[#allocation4] sm:$0xff] %v929
      %931 = vst [vmem:[#allocation2] sm:$0xff] %v914
      %p932 = scmp.eq.s32.totalorder %s24, 2
      // Predicated region
      $region69: #{bahdanau_decoder_step.2} parent=63 // pred_check
        %p933 = pneg %p932
      $region70: #{bahdanau_decoder_step.2} parent=63 // pred_check_branch
        %935 = sbr.rel (%p933) target = $region72
      $region71: #{bahdanau_decoder_step.2} parent=63 // pred_region
        %v936 = vld [vmem:[#allocation4] sm:$0xff]
        %v937 = vld [vmem:[#allocation3] sm:$0xff]
        %v938 = vrcp.pop %v937
        %v939 = vmul.f32 %v937, %v938
        %v940 = vsub.f32 1.0, %v939
        %v941 = vmul.f32 %v938, %v940
        %v942 = vadd.f32 %v938, %v941
        %vm943 = vweird.f32 %v937
        %vm944 = vweird.f32 %v938
        %vm945 = vmor %vm943, %vm944
        %v946 = vsel %vm945, %v938, %v942
        %v947 = vand.u32 2147483647, %v937
        %vm948 = vcmp.eq.f32.partialorder %v947, 8.507059e+37
        %v949 = vand.u32 %v937, 2147483648
        %v950 = vor.u32 1.1754944e-38, %v949
        %v951 = vsel %vm948, %v950, %v946
        %v952 = vmul.f32 %v936, %v951
        %v953 = vld [vmem:[%s3] sm:$0xff]
        %s954 = scalar_lea.vmem %s3, 8
        %v955 = vld [vmem:[%s954] sm:$0xff]
        %v956 = vld [vmem:[%s2] sm:$0xff]
        %v957 = vpack.c.bf16 %v956, %v956
        %v958 = vpack.c.bf16 %v952, %v952
        %v959 = vpack.c.bf16 %v953, %v953
        %v960 = vld [vmem:[%s9] sm:$0xff]
        %v961 = vld [vmem:[%s9 + $0x8] sm:$0xff]
        %v962 = vld [vmem:[%s9 + $0x10] sm:$0xff]
        %v963 = vld [vmem:[%s9 + $0x18] sm:$0xff]
        %v964 = vld [vmem:[%s9 + $0x20] sm:$0xff]
        %v965 = vld [vmem:[%s9 + $0x28] sm:$0xff]
        %v966 = vld [vmem:[%s9 + $0x30] sm:$0xff]
        %v967 = vld [vmem:[%s9 + $0x38] sm:$0xff]
        %v968 = vld [vmem:[%s9 + $0x40] sm:$0xff]
        %v969 = vld [vmem:[%s9 + $0x48] sm:$0xff]
        %v970 = vld [vmem:[%s9 + $0x50] sm:$0xff]
        %v971 = vld [vmem:[%s9 + $0x58] sm:$0xff]
        %v972 = vld [vmem:[%s9 + $0x60] sm:$0xff]
        %v973 = vld [vmem:[%s9 + $0x68] sm:$0xff]
        %v974 = vld [vmem:[%s9 + $0x70] sm:$0xff]
        %v975 = vld [vmem:[%s9 + $0x78] sm:$0xff]
        %v976 = vld [vmem:[%s9 + $0x80] sm:$0xff]
        %v977 = vld [vmem:[%s9 + $0x88] sm:$0xff]
        %v978 = vld [vmem:[%s9 + $0x90] sm:$0xff]
        %v979 = vld [vmem:[%s9 + $0x98] sm:$0xff]
        %v980 = vld [vmem:[%s9 + $0xa0] sm:$0xff]
        %v981 = vld [vmem:[%s9 + $0xa8] sm:$0xff]
        %v982 = vld [vmem:[%s9 + $0xb0] sm:$0xff]
        %v983 = vld [vmem:[%s9 + $0xb8] sm:$0xff]
        %v984 = vld [vmem:[%s9 + $0xc0] sm:$0xff]
        %v985 = vld [vmem:[%s9 + $0xc8] sm:$0xff]
        %v986 = vld [vmem:[%s9 + $0xd0] sm:$0xff]
        %v987 = vld [vmem:[%s9 + $0xd8] sm:$0xff]
        %v988 = vld [vmem:[%s9 + $0xe0] sm:$0xff]
        %v989 = vld [vmem:[%s9 + $0xe8] sm:$0xff]
        %v990 = vld [vmem:[%s9 + $0xf0] sm:$0xff]
        %v991 = vld [vmem:[%s9 + $0xf8] sm:$0xff]
        %v992 = vld [vmem:[%s9 + $0x100] sm:$0xff]
        %v993 = vld [vmem:[%s9 + $0x108] sm:$0xff]
        %v994 = vld [vmem:[%s9 + $0x110] sm:$0xff]
        %v995 = vld [vmem:[%s9 + $0x118] sm:$0xff]
        %v996 = vld [vmem:[%s9 + $0x120] sm:$0xff]
        %v997 = vld [vmem:[%s9 + $0x128] sm:$0xff]
        %v998 = vld [vmem:[%s9 + $0x130] sm:$0xff]
        %v999 = vld [vmem:[%s9 + $0x138] sm:$0xff]
        %v1000 = vld [vmem:[%s9 + $0x140] sm:$0xff]
        %v1001 = vld [vmem:[%s9 + $0x148] sm:$0xff]
        %v1002 = vld [vmem:[%s9 + $0x150] sm:$0xff]
        %v1003 = vld [vmem:[%s9 + $0x158] sm:$0xff]
        %v1004 = vld [vmem:[%s9 + $0x160] sm:$0xff]
        %v1005 = vld [vmem:[%s9 + $0x168] sm:$0xff]
        %v1006 = vld [vmem:[%s9 + $0x170] sm:$0xff]
        %v1007 = vld [vmem:[%s9 + $0x178] sm:$0xff]
        %v1008 = vld [vmem:[%s9 + $0x180] sm:$0xff]
        %v1009 = vld [vmem:[%s9 + $0x188] sm:$0xff]
        %v1010 = vld [vmem:[%s9 + $0x190] sm:$0xff]
        %v1011 = vld [vmem:[%s9 + $0x198] sm:$0xff]
        %v1012 = vld [vmem:[%s9 + $0x1a0] sm:$0xff]
        %v1013 = vld [vmem:[%s9 + $0x1a8] sm:$0xff]
        %v1014 = vld [vmem:[%s9 + $0x1b0] sm:$0xff]
        %v1015 = vld [vmem:[%s9 + $0x1b8] sm:$0xff]
        %v1016 = vld [vmem:[%s9 + $0x1c0] sm:$0xff]
        %v1017 = vld [vmem:[%s9 + $0x1c8] sm:$0xff]
        %v1018 = vld [vmem:[%s9 + $0x1d0] sm:$0xff]
        %v1019 = vld [vmem:[%s9 + $0x1d8] sm:$0xff]
        %v1020 = vld [vmem:[%s9 + $0x1e0] sm:$0xff]
        %v1021 = vld [vmem:[%s9 + $0x1e8] sm:$0xff]
        %v1022 = vld [vmem:[%s9 + $0x1f0] sm:$0xff]
        %v1023 = vld [vmem:[%s9 + $0x1f8] sm:$0xff]
        %v1024 = vld [vmem:[%s9 + $0x200] sm:$0xff]
        %v1025 = vld [vmem:[%s9 + $0x208] sm:$0xff]
        %v1026 = vld [vmem:[%s9 + $0x210] sm:$0xff]
        %v1027 = vld [vmem:[%s9 + $0x218] sm:$0xff]
        %v1028 = vld [vmem:[%s9 + $0x220] sm:$0xff]
        %v1029 = vld [vmem:[%s9 + $0x228] sm:$0xff]
        %v1030 = vld [vmem:[%s9 + $0x230] sm:$0xff]
        %v1031 = vld [vmem:[%s9 + $0x238] sm:$0xff]
        %v1032 = vld [vmem:[%s9 + $0x240] sm:$0xff]
        %v1033 = vld [vmem:[%s9 + $0x248] sm:$0xff]
        %v1034 = vld [vmem:[%s9 + $0x250] sm:$0xff]
        %v1035 = vld [vmem:[%s9 + $0x258] sm:$0xff]
        %v1036 = vld [vmem:[%s9 + $0x260] sm:$0xff]
        %v1037 = vld [vmem:[%s9 + $0x268] sm:$0xff]
        %v1038 = vld [vmem:[%s9 + $0x270] sm:$0xff]
        %v1039 = vld [vmem:[%s9 + $0x278] sm:$0xff]
        %v1040 = vld [vmem:[%s9 + $0x280] sm:$0xff]
        %v1041 = vld [vmem:[%s9 + $0x288] sm:$0xff]
        %v1042 = vld [vmem:[%s9 + $0x290] sm:$0xff]
        %v1043 = vld [vmem:[%s9 + $0x298] sm:$0xff]
        %v1044 = vld [vmem:[%s9 + $0x2a0] sm:$0xff]
        %v1045 = vld [vmem:[%s9 + $0x2a8] sm:$0xff]
        %v1046 = vld [vmem:[%s9 + $0x2b0] sm:$0xff]
        %v1047 = vld [vmem:[%s9 + $0x2b8] sm:$0xff]
        %v1048 = vld [vmem:[%s9 + $0x2c0] sm:$0xff]
        %v1049 = vld [vmem:[%s9 + $0x2c8] sm:$0xff]
        %v1050 = vld [vmem:[%s9 + $0x2d0] sm:$0xff]
        %v1051 = vld [vmem:[%s9 + $0x2d8] sm:$0xff]
        %v1052 = vld [vmem:[%s9 + $0x2e0] sm:$0xff]
        %v1053 = vld [vmem:[%s9 + $0x2e8] sm:$0xff]
        %v1054 = vld [vmem:[%s9 + $0x2f0] sm:$0xff]
        %v1055 = vld [vmem:[%s9 + $0x2f8] sm:$0xff]
        %v1056 = vld [vmem:[%s10] sm:$0xf]
        %v1058 = vperm.slane %v1056, 0
        %v1059 = vperm.slane %v1056, 1
        %v1060 = vperm.slane %v1056, 2
        %v1061 = vperm.slane %v1056, 3
        %v1162 = vunpack.c.l.b16 %v960
        %v1163 = vunpack.c.h.b16 %v960
        %v1164 = vunpack.c.l.b16 %v961
        %v1165 = vunpack.c.h.b16 %v961
        %v1166 = vunpack.c.l.b16 %v962
        %v1167 = vunpack.c.h.b16 %v962
        %v1168 = vunpack.c.l.b16 %v963
        %v1169 = vunpack.c.h.b16 %v963
        %v1170 = vunpack.c.l.b16 %v964
        %v1171 = vunpack.c.h.b16 %v964
        %v1172 = vunpack.c.l.b16 %v965
        %v1173 = vunpack.c.h.b16 %v965
        %v1174 = vunpack.c.l.b16 %v966
        %v1175 = vunpack.c.h.b16 %v966
        %v1176 = vunpack.c.l.b16 %v967
        %v1177 = vunpack.c.h.b16 %v967
        %v1178 = vunpack.c.l.b16 %v968
        %v1179 = vunpack.c.h.b16 %v968
        %v1180 = vunpack.c.l.b16 %v969
        %v1181 = vunpack.c.h.b16 %v969
        %v1182 = vunpack.c.l.b16 %v970
        %v1183 = vunpack.c.h.b16 %v970
        %v1184 = vunpack.c.l.b16 %v971
        %v1185 = vunpack.c.h.b16 %v971
        %v1186 = vunpack.c.l.b16 %v972
        %v1187 = vunpack.c.h.b16 %v972
        %v1188 = vunpack.c.l.b16 %v973
        %v1189 = vunpack.c.h.b16 %v973
        %v1190 = vunpack.c.l.b16 %v974
        %v1191 = vunpack.c.h.b16 %v974
        %v1192 = vunpack.c.l.b16 %v975
        %v1193 = vunpack.c.h.b16 %v975
        %v1194 = vunpack.c.l.b16 %v976
        %v1195 = vunpack.c.h.b16 %v976
        %v1196 = vunpack.c.l.b16 %v977
        %v1197 = vunpack.c.h.b16 %v977
        %v1198 = vunpack.c.l.b16 %v978
        %v1199 = vunpack.c.h.b16 %v978
        %v1200 = vunpack.c.l.b16 %v979
        %v1201 = vunpack.c.h.b16 %v979
        %v1202 = vunpack.c.l.b16 %v980
        %v1203 = vunpack.c.h.b16 %v980
        %v1204 = vunpack.c.l.b16 %v981
        %v1205 = vunpack.c.h.b16 %v981
        %v1206 = vunpack.c.l.b16 %v982
        %v1207 = vunpack.c.h.b16 %v982
        %v1208 = vunpack.c.l.b16 %v983
        %v1209 = vunpack.c.h.b16 %v983
        %v1210 = vunpack.c.l.b16 %v984
        %v1211 = vunpack.c.h.b16 %v984
        %v1212 = vunpack.c.l.b16 %v985
        %v1213 = vunpack.c.h.b16 %v985
        %v1214 = vunpack.c.l.b16 %v986
        %v1215 = vunpack.c.h.b16 %v986
        %v1216 = vunpack.c.l.b16 %v987
        %v1217 = vunpack.c.h.b16 %v987
        %v1218 = vunpack.c.l.b16 %v988
        %v1219 = vunpack.c.h.b16 %v988
        %v1220 = vunpack.c.l.b16 %v989
        %v1221 = vunpack.c.h.b16 %v989
        %v1222 = vunpack.c.l.b16 %v990
        %v1223 = vunpack.c.h.b16 %v990
        %v1224 = vunpack.c.l.b16 %v991
        %v1225 = vunpack.c.h.b16 %v991
        %v1226 = vunpack.c.l.b16 %v992
        %v1227 = vunpack.c.h.b16 %v992
        %v1228 = vunpack.c.l.b16 %v993
        %v1229 = vunpack.c.h.b16 %v993
        %v1230 = vunpack.c.l.b16 %v994
        %v1231 = vunpack.c.h.b16 %v994
        %v1232 = vunpack.c.l.b16 %v995
        %v1233 = vunpack.c.h.b16 %v995
        %v1234 = vunpack.c.l.b16 %v996
        %v1235 = vunpack.c.h.b16 %v996
        %v1236 = vunpack.c.l.b16 %v997
        %v1237 = vunpack.c.h.b16 %v997
        %v1238 = vunpack.c.l.b16 %v998
        %v1239 = vunpack.c.h.b16 %v998
        %v1240 = vunpack.c.l.b16 %v999
        %v1241 = vunpack.c.h.b16 %v999
        %v1242 = vunpack.c.l.b16 %v1000
        %v1243 = vunpack.c.h.b16 %v1000
        %v1244 = vunpack.c.l.b16 %v1001
        %v1245 = vunpack.c.h.b16 %v1001
        %v1246 = vunpack.c.l.b16 %v1002
        %v1247 = vunpack.c.h.b16 %v1002
        %v1248 = vunpack.c.l.b16 %v1003
        %v1249 = vunpack.c.h.b16 %v1003
        %v1250 = vunpack.c.l.b16 %v1004
        %v1251 = vunpack.c.h.b16 %v1004
        %v1252 = vunpack.c.l.b16 %v1005
        %v1253 = vunpack.c.h.b16 %v1005
        %v1254 = vunpack.c.l.b16 %v1006
        %v1255 = vunpack.c.h.b16 %v1006
        %v1256 = vunpack.c.l.b16 %v1007
        %v1257 = vunpack.c.h.b16 %v1007
        %v1258 = vunpack.c.l.b16 %v1008
        %v1259 = vunpack.c.h.b16 %v1008
        %v1260 = vunpack.c.l.b16 %v1009
        %v1261 = vunpack.c.h.b16 %v1009
        %v1262 = vunpack.c.l.b16 %v1010
        %v1263 = vunpack.c.h.b16 %v1010
        %v1264 = vunpack.c.l.b16 %v1011
        %v1265 = vunpack.c.h.b16 %v1011
        %v1266 = vunpack.c.l.b16 %v1012
        %v1267 = vunpack.c.h.b16 %v1012
        %v1268 = vunpack.c.l.b16 %v1013
        %v1269 = vunpack.c.h.b16 %v1013
        %v1270 = vunpack.c.l.b16 %v1014
        %v1271 = vunpack.c.h.b16 %v1014
        %v1272 = vunpack.c.l.b16 %v1015
        %v1273 = vunpack.c.h.b16 %v1015
        %v1274 = vunpack.c.l.b16 %v1016
        %v1275 = vunpack.c.h.b16 %v1016
        %v1276 = vunpack.c.l.b16 %v1017
        %v1277 = vunpack.c.h.b16 %v1017
        %v1278 = vunpack.c.l.b16 %v1018
        %v1279 = vunpack.c.h.b16 %v1018
        %v1280 = vunpack.c.l.b16 %v1019
        %v1281 = vunpack.c.h.b16 %v1019
        %v1282 = vunpack.c.l.b16 %v1020
        %v1283 = vunpack.c.h.b16 %v1020
        %v1284 = vunpack.c.l.b16 %v1021
        %v1285 = vunpack.c.h.b16 %v1021
        %v1286 = vunpack.c.l.b16 %v1022
        %v1287 = vunpack.c.h.b16 %v1022
        %v1288 = vunpack.c.l.b16 %v1023
        %v1289 = vunpack.c.h.b16 %v1023
        %v1290 = vunpack.c.l.b16 %v1024
        %v1291 = vunpack.c.h.b16 %v1024
        %v1292 = vunpack.c.l.b16 %v1025
        %v1293 = vunpack.c.h.b16 %v1025
        %v1294 = vunpack.c.l.b16 %v1026
        %v1295 = vunpack.c.h.b16 %v1026
        %v1296 = vunpack.c.l.b16 %v1027
        %v1297 = vunpack.c.h.b16 %v1027
        %v1298 = vunpack.c.l.b16 %v1028
        %v1299 = vunpack.c.h.b16 %v1028
        %v1300 = vunpack.c.l.b16 %v1029
        %v1301 = vunpack.c.h.b16 %v1029
        %v1302 = vunpack.c.l.b16 %v1030
        %v1303 = vunpack.c.h.b16 %v1030
        %v1304 = vunpack.c.l.b16 %v1031
        %v1305 = vunpack.c.h.b16 %v1031
        %v1306 = vunpack.c.l.b16 %v1032
        %v1307 = vunpack.c.h.b16 %v1032
        %v1308 = vunpack.c.l.b16 %v1033
        %v1309 = vunpack.c.h.b16 %v1033
        %v1310 = vunpack.c.l.b16 %v1034
        %v1311 = vunpack.c.h.b16 %v1034
        %v1312 = vunpack.c.l.b16 %v1035
        %v1313 = vunpack.c.h.b16 %v1035
        %v1314 = vunpack.c.l.b16 %v1036
        %v1315 = vunpack.c.h.b16 %v1036
        %v1316 = vunpack.c.l.b16 %v1037
        %v1317 = vunpack.c.h.b16 %v1037
        %v1318 = vunpack.c.l.b16 %v1038
        %v1319 = vunpack.c.h.b16 %v1038
        %v1320 = vunpack.c.l.b16 %v1039
        %v1321 = vunpack.c.h.b16 %v1039
        %v1322 = vunpack.c.l.b16 %v1040
        %v1323 = vunpack.c.h.b16 %v1040
        %v1324 = vunpack.c.l.b16 %v1041
        %v1325 = vunpack.c.h.b16 %v1041
        %v1326 = vunpack.c.l.b16 %v1042
        %v1327 = vunpack.c.h.b16 %v1042
        %v1328 = vunpack.c.l.b16 %v1043
        %v1329 = vunpack.c.h.b16 %v1043
        %v1330 = vunpack.c.l.b16 %v1044
        %v1331 = vunpack.c.h.b16 %v1044
        %v1332 = vunpack.c.l.b16 %v1045
        %v1333 = vunpack.c.h.b16 %v1045
        %v1334 = vunpack.c.l.b16 %v1046
        %v1335 = vunpack.c.h.b16 %v1046
        %v1336 = vunpack.c.l.b16 %v1047
        %v1337 = vunpack.c.h.b16 %v1047
        %v1338 = vunpack.c.l.b16 %v1048
        %v1339 = vunpack.c.h.b16 %v1048
        %v1340 = vunpack.c.l.b16 %v1049
        %v1341 = vunpack.c.h.b16 %v1049
        %v1342 = vunpack.c.l.b16 %v1050
        %v1343 = vunpack.c.h.b16 %v1050
        %v1344 = vunpack.c.l.b16 %v1051
        %v1345 = vunpack.c.h.b16 %v1051
        %v1346 = vunpack.c.l.b16 %v1052
        %v1347 = vunpack.c.h.b16 %v1052
        %v1348 = vunpack.c.l.b16 %v1053
        %v1349 = vunpack.c.h.b16 %v1053
        %v1350 = vunpack.c.l.b16 %v1054
        %v1351 = vunpack.c.h.b16 %v1054
        %v1352 = vunpack.c.l.b16 %v1055
        %v1353 = vunpack.c.h.b16 %v1055
        %v1354 = vpack.c.b16 %v1166, %v1162
        %v1355 = vpack.c.b16 %v1167, %v1163
        %v1356 = vpack.c.b16 %v1168, %v1164
        %v1357 = vpack.c.b16 %v1169, %v1165
        %v1358 = vpack.c.b16 %v1174, %v1170
        %v1359 = vpack.c.b16 %v1175, %v1171
        %v1360 = vpack.c.b16 %v1176, %v1172
        %v1361 = vpack.c.b16 %v1177, %v1173
        %v1362 = vpack.c.b16 %v1182, %v1178
        %v1363 = vpack.c.b16 %v1183, %v1179
        %v1364 = vpack.c.b16 %v1184, %v1180
        %v1365 = vpack.c.b16 %v1185, %v1181
        %v1366 = vpack.c.b16 %v1190, %v1186
        %v1367 = vpack.c.b16 %v1191, %v1187
        %v1368 = vpack.c.b16 %v1192, %v1188
        %v1369 = vpack.c.b16 %v1193, %v1189
        %v1370 = vpack.c.b16 %v1198, %v1194
        %v1371 = vpack.c.b16 %v1199, %v1195
        %v1372 = vpack.c.b16 %v1200, %v1196
        %v1373 = vpack.c.b16 %v1201, %v1197
        %v1374 = vpack.c.b16 %v1206, %v1202
        %v1375 = vpack.c.b16 %v1207, %v1203
        %v1376 = vpack.c.b16 %v1208, %v1204
        %v1377 = vpack.c.b16 %v1209, %v1205
        %v1378 = vpack.c.b16 %v1214, %v1210
        %v1379 = vpack.c.b16 %v1215, %v1211
        %v1380 = vpack.c.b16 %v1216, %v1212
        %v1381 = vpack.c.b16 %v1217, %v1213
        %v1382 = vpack.c.b16 %v1222, %v1218
        %v1383 = vpack.c.b16 %v1223, %v1219
        %v1384 = vpack.c.b16 %v1224, %v1220
        %v1385 = vpack.c.b16 %v1225, %v1221
        %v1386 = vpack.c.b16 %v1230, %v1226
        %v1387 = vpack.c.b16 %v1231, %v1227
        %v1388 = vpack.c.b16 %v1232, %v1228
        %v1389 = vpack.c.b16 %v1233, %v1229
        %v1390 = vpack.c.b16 %v1238, %v1234
        %v1391 = vpack.c.b16 %v1239, %v1235
        %v1392 = vpack.c.b16 %v1240, %v1236
        %v1393 = vpack.c.b16 %v1241, %v1237
        %v1394 = vpack.c.b16 %v1246, %v1242
        %v1395 = vpack.c.b16 %v1247, %v1243
        %v1396 = vpack.c.b16 %v1248, %v1244
        %v1397 = vpack.c.b16 %v1249, %v1245
        %v1398 = vpack.c.b16 %v1254, %v1250
        %v1399 = vpack.c.b16 %v1255, %v1251
        %v1400 = vpack.c.b16 %v1256, %v1252
        %v1401 = vpack.c.b16 %v1257, %v1253
        %v1402 = vpack.c.b16 %v1262, %v1258
        %v1403 = vpack.c.b16 %v1263, %v1259
        %v1404 = vpack.c.b16 %v1264, %v1260
        %v1405 = vpack.c.b16 %v1265, %v1261
        %v1406 = vpack.c.b16 %v1270, %v1266
        %v1407 = vpack.c.b16 %v1271, %v1267
        %v1408 = vpack.c.b16 %v1272, %v1268
        %v1409 = vpack.c.b16 %v1273, %v1269
        %v1410 = vpack.c.b16 %v1278, %v1274
        %v1411 = vpack.c.b16 %v1279, %v1275
        %v1412 = vpack.c.b16 %v1280, %v1276
        %v1413 = vpack.c.b16 %v1281, %v1277
        %v1414 = vpack.c.b16 %v1286, %v1282
        %v1415 = vpack.c.b16 %v1287, %v1283
        %v1416 = vpack.c.b16 %v1288, %v1284
        %v1417 = vpack.c.b16 %v1289, %v1285
        %v1418 = vpack.c.b16 %v1294, %v1290
        %v1419 = vpack.c.b16 %v1295, %v1291
        %v1420 = vpack.c.b16 %v1296, %v1292
        %v1421 = vpack.c.b16 %v1297, %v1293
        %v1422 = vpack.c.b16 %v1302, %v1298
        %v1423 = vpack.c.b16 %v1303, %v1299
        %v1424 = vpack.c.b16 %v1304, %v1300
        %v1425 = vpack.c.b16 %v1305, %v1301
        %v1426 = vpack.c.b16 %v1310, %v1306
        %v1427 = vpack.c.b16 %v1311, %v1307
        %v1428 = vpack.c.b16 %v1312, %v1308
        %v1429 = vpack.c.b16 %v1313, %v1309
        %v1430 = vpack.c.b16 %v1318, %v1314
        %v1431 = vpack.c.b16 %v1319, %v1315
        %v1432 = vpack.c.b16 %v1320, %v1316
        %v1433 = vpack.c.b16 %v1321, %v1317
        %v1434 = vpack.c.b16 %v1326, %v1322
        %v1435 = vpack.c.b16 %v1327, %v1323
        %v1436 = vpack.c.b16 %v1328, %v1324
        %v1437 = vpack.c.b16 %v1329, %v1325
        %v1438 = vpack.c.b16 %v1334, %v1330
        %v1439 = vpack.c.b16 %v1335, %v1331
        %v1440 = vpack.c.b16 %v1336, %v1332
        %v1441 = vpack.c.b16 %v1337, %v1333
        %v1442 = vpack.c.b16 %v1342, %v1338
        %v1443 = vpack.c.b16 %v1343, %v1339
        %v1444 = vpack.c.b16 %v1344, %v1340
        %v1445 = vpack.c.b16 %v1345, %v1341
        %v1446 = vpack.c.b16 %v1350, %v1346
        %v1447 = vpack.c.b16 %v1351, %v1347
        %v1448 = vpack.c.b16 %v1352, %v1348
        %v1449 = vpack.c.b16 %v1353, %v1349
        %1546 = vmatpush.bf16.msra.mxu0 %v1382
        %1547 = vmatpush.bf16.msra.mxu0 %v1378
        %1548 = vmatpush.bf16.msra.mxu0 %v1374
        %1549 = vmatpush.bf16.msra.mxu0 %v1370
        %1550 = vmatpush.bf16.msra.mxu0 %v1366
        %1551 = vmatpush.bf16.msra.mxu0 %v1362
        %1552 = vmatpush.bf16.msra.mxu0 %v1358
        %1553 = vmatpush.bf16.msra.mxu0 %v1354
        %1554 = vmatmul.bf16.gmra.mxu0 %v957
        %v1555 = vpop.f32.mrf.mxu0
        %v1556 = vadd.f32 %v1058, %v1555
        %v1557 = vpop.f32.mrf.mxu0
        %1558 = vdwg.mxu0
        %1559 = vmatpush.bf16.msra.mxu0 %v1414
        %1560 = vmatpush.bf16.msra.mxu0 %v1410
        %1561 = vmatpush.bf16.msra.mxu0 %v1406
        %1562 = vmatpush.bf16.msra.mxu0 %v1402
        %1563 = vmatpush.bf16.msra.mxu0 %v1398
        %1564 = vmatpush.bf16.msra.mxu0 %v1394
        %1565 = vmatpush.bf16.msra.mxu0 %v1390
        %1566 = vmatpush.bf16.msra.mxu0 %v1386
        %1567 = vmatmul.bf16.gmra.mxu0 %v958
        %v1568 = vpop.f32.mrf.mxu0
        %v1569 = vadd.f32 %v1556, %v1568
        %v1570 = vpop.f32.mrf.mxu0
        %1571 = vdwg.mxu0
        %1572 = vmatpush.bf16.msra.mxu0 %v1446
        %1573 = vmatpush.bf16.msra.mxu0 %v1442
        %1574 = vmatpush.bf16.msra.mxu0 %v1438
        %1575 = vmatpush.bf16.msra.mxu0 %v1434
        %1576 = vmatpush.bf16.msra.mxu0 %v1430
        %1577 = vmatpush.bf16.msra.mxu0 %v1426
        %1578 = vmatpush.bf16.msra.mxu0 %v1422
        %1579 = vmatpush.bf16.msra.mxu0 %v1418
        %1580 = vmatmul.bf16.gmra.mxu0 %v959
        %v1581 = vpop.f32.mrf.mxu0
        %v1582 = vadd.f32 %v1569, %v1581
        %v1583 = vpop.f32.mrf.mxu0
        %1584 = vdwg.mxu0
        %1585 = vmatpush.bf16.msra.mxu0 %v1383
        %1586 = vmatpush.bf16.msra.mxu0 %v1379
        %1587 = vmatpush.bf16.msra.mxu0 %v1375
        %1588 = vmatpush.bf16.msra.mxu0 %v1371
        %1589 = vmatpush.bf16.msra.mxu0 %v1367
        %1590 = vmatpush.bf16.msra.mxu0 %v1363
        %1591 = vmatpush.bf16.msra.mxu0 %v1359
        %1592 = vmatpush.bf16.msra.mxu0 %v1355
        %1593 = vmatmul.bf16.gmra.mxu0 %v957
        %v1594 = vpop.f32.mrf.mxu0
        %v1595 = vadd.f32 %v1059, %v1594
        %v1596 = vpop.f32.mrf.mxu0
        %1597 = vdwg.mxu0
        %1598 = vmatpush.bf16.msra.mxu0 %v1415
        %1599 = vmatpush.bf16.msra.mxu0 %v1411
        %1600 = vmatpush.bf16.msra.mxu0 %v1407
        %1601 = vmatpush.bf16.msra.mxu0 %v1403
        %1602 = vmatpush.bf16.msra.mxu0 %v1399
        %1603 = vmatpush.bf16.msra.mxu0 %v1395
        %1604 = vmatpush.bf16.msra.mxu0 %v1391
        %1605 = vmatpush.bf16.msra.mxu0 %v1387
        %1606 = vmatmul.bf16.gmra.mxu0 %v958
        %v1607 = vpop.f32.mrf.mxu0
        %v1608 = vadd.f32 %v1595, %v1607
        %v1609 = vpop.f32.mrf.mxu0
        %1610 = vdwg.mxu0
        %1611 = vmatpush.bf16.msra.mxu0 %v1447
        %1612 = vmatpush.bf16.msra.mxu0 %v1443
        %1613 = vmatpush.bf16.msra.mxu0 %v1439
        %1614 = vmatpush.bf16.msra.mxu0 %v1435
        %1615 = vmatpush.bf16.msra.mxu0 %v1431
        %1616 = vmatpush.bf16.msra.mxu0 %v1427
        %1617 = vmatpush.bf16.msra.mxu0 %v1423
        %1618 = vmatpush.bf16.msra.mxu0 %v1419
        %1619 = vmatmul.bf16.gmra.mxu0 %v959
        %v1620 = vpop.f32.mrf.mxu0
        %v1621 = vadd.f32 %v1608, %v1620
        %v1622 = vpop.f32.mrf.mxu0
        %1623 = vdwg.mxu0
        %1624 = vmatpush.bf16.msra.mxu0 %v1384
        %1625 = vmatpush.bf16.msra.mxu0 %v1380
        %1626 = vmatpush.bf16.msra.mxu0 %v1376
        %1627 = vmatpush.bf16.msra.mxu0 %v1372
        %1628 = vmatpush.bf16.msra.mxu0 %v1368
        %1629 = vmatpush.bf16.msra.mxu0 %v1364
        %1630 = vmatpush.bf16.msra.mxu0 %v1360
        %1631 = vmatpush.bf16.msra.mxu0 %v1356
        %1632 = vmatmul.bf16.gmra.mxu0 %v957
        %v1633 = vpop.f32.mrf.mxu0
        %v1634 = vadd.f32 %v1060, %v1633
        %v1635 = vpop.f32.mrf.mxu0
        %1636 = vdwg.mxu0
        %1637 = vmatpush.bf16.msra.mxu0 %v1416
        %1638 = vmatpush.bf16.msra.mxu0 %v1412
        %1639 = vmatpush.bf16.msra.mxu0 %v1408
        %1640 = vmatpush.bf16.msra.mxu0 %v1404
        %1641 = vmatpush.bf16.msra.mxu0 %v1400
        %1642 = vmatpush.bf16.msra.mxu0 %v1396
        %1643 = vmatpush.bf16.msra.mxu0 %v1392
        %1644 = vmatpush.bf16.msra.mxu0 %v1388
        %1645 = vmatmul.bf16.gmra.mxu0 %v958
        %v1646 = vpop.f32.mrf.mxu0
        %v1647 = vadd.f32 %v1634, %v1646
        %v1648 = vpop.f32.mrf.mxu0
        %1649 = vdwg.mxu0
        %1650 = vmatpush.bf16.msra.mxu0 %v1448
        %1651 = vmatpush.bf16.msra.mxu0 %v1444
        %1652 = vmatpush.bf16.msra.mxu0 %v1440
        %1653 = vmatpush.bf16.msra.mxu0 %v1436
        %1654 = vmatpush.bf16.msra.mxu0 %v1432
        %1655 = vmatpush.bf16.msra.mxu0 %v1428
        %1656 = vmatpush.bf16.msra.mxu0 %v1424
        %1657 = vmatpush.bf16.msra.mxu0 %v1420
        %1658 = vmatmul.bf16.gmra.mxu0 %v959
        %v1659 = vpop.f32.mrf.mxu0
        %v1660 = vadd.f32 %v1647, %v1659
        %v1661 = vpop.f32.mrf.mxu0
        %1662 = vdwg.mxu0
        %1663 = vmatpush.bf16.msra.mxu0 %v1385
        %1664 = vmatpush.bf16.msra.mxu0 %v1381
        %1665 = vmatpush.bf16.msra.mxu0 %v1377
        %1666 = vmatpush.bf16.msra.mxu0 %v1373
        %1667 = vmatpush.bf16.msra.mxu0 %v1369
        %1668 = vmatpush.bf16.msra.mxu0 %v1365
        %1669 = vmatpush.bf16.msra.mxu0 %v1361
        %1670 = vmatpush.bf16.msra.mxu0 %v1357
        %1671 = vmatmul.bf16.gmra.mxu0 %v957
        %v1672 = vpop.f32.mrf.mxu0
        %v1673 = vadd.f32 %v1061, %v1672
        %v1674 = vpop.f32.mrf.mxu0
        %1675 = vdwg.mxu0
        %1676 = vmatpush.bf16.msra.mxu0 %v1417
        %1677 = vmatpush.bf16.msra.mxu0 %v1413
        %1678 = vmatpush.bf16.msra.mxu0 %v1409
        %1679 = vmatpush.bf16.msra.mxu0 %v1405
        %1680 = vmatpush.bf16.msra.mxu0 %v1401
        %1681 = vmatpush.bf16.msra.mxu0 %v1397
        %1682 = vmatpush.bf16.msra.mxu0 %v1393
        %1683 = vmatpush.bf16.msra.mxu0 %v1389
        %1684 = vmatmul.bf16.gmra.mxu0 %v958
        %v1685 = vpop.f32.mrf.mxu0
        %v1686 = vadd.f32 %v1673, %v1685
        %v1687 = vpop.f32.mrf.mxu0
        %1688 = vdwg.mxu0
        %1689 = vmatpush.bf16.msra.mxu0 %v1449
        %1690 = vmatpush.bf16.msra.mxu0 %v1445
        %1691 = vmatpush.bf16.msra.mxu0 %v1441
        %1692 = vmatpush.bf16.msra.mxu0 %v1437
        %1693 = vmatpush.bf16.msra.mxu0 %v1433
        %1694 = vmatpush.bf16.msra.mxu0 %v1429
        %1695 = vmatpush.bf16.msra.mxu0 %v1425
        %1696 = vmatpush.bf16.msra.mxu0 %v1421
        %1697 = vmatmul.bf16.gmra.mxu0 %v959
        %v1698 = vpop.f32.mrf.mxu0
        %v1699 = vadd.f32 %v1686, %v1698
        %v1700 = vpop.f32.mrf.mxu0
        %1701 = vdwg.mxu0
        %v1702 = vxor.u32 %v1582, 2147483648
        %v1703 = vmul.f32 %v1702, 1.442695
        %v1704 = vpow.pop %v1703
        %v1705 = vadd.f32 %v1704, 1.0
        %v1706 = vrcp.pop %v1705
        %v1707 = vmul.f32 %v1705, %v1706
        %v1708 = vsub.f32 1.0, %v1707
        %v1709 = vmul.f32 %v1706, %v1708
        %v1710 = vadd.f32 %v1706, %v1709
        %vm1711 = vweird.f32 %v1705
        %vm1712 = vweird.f32 %v1706
        %vm1713 = vmor %vm1711, %vm1712
        %v1714 = vsel %vm1713, %v1706, %v1710
        %v1715 = vand.u32 2147483647, %v1705
        %vm1716 = vcmp.eq.f32.partialorder %v1715, 8.507059e+37
        %v1717 = vand.u32 %v1705, 2147483648
        %v1718 = vor.u32 1.1754944e-38, %v1717
        %v1719 = vsel %vm1716, %v1718, %v1714
        %v1720 = vmul.f32 1.0, %v1719
        %v1721 = vxor.u32 %v1621, 2147483648
        %v1722 = vmul.f32 %v1721, 1.442695
        %v1723 = vpow.pop %v1722
        %v1724 = vadd.f32 %v1723, 1.0
        %v1725 = vrcp.pop %v1724
        %v1726 = vmul.f32 %v1724, %v1725
        %v1727 = vsub.f32 1.0, %v1726
        %v1728 = vmul.f32 %v1725, %v1727
        %v1729 = vadd.f32 %v1725, %v1728
        %vm1730 = vweird.f32 %v1724
        %vm1731 = vweird.f32 %v1725
        %vm1732 = vmor %vm1730, %vm1731
        %v1733 = vsel %vm1732, %v1725, %v1729
        %v1734 = vand.u32 2147483647, %v1724
        %vm1735 = vcmp.eq.f32.partialorder %v1734, 8.507059e+37
        %v1736 = vand.u32 %v1724, 2147483648
        %v1737 = vor.u32 1.1754944e-38, %v1736
        %v1738 = vsel %vm1735, %v1737, %v1733
        %v1739 = vmul.f32 1.0, %v1738
        %v1740 = vtanh.pop %v1660
        %v1741 = vxor.u32 %v1699, 2147483648
        %v1742 = vmul.f32 %v1741, 1.442695
        %v1743 = vpow.pop %v1742
        %v1744 = vadd.f32 %v1743, 1.0
        %v1745 = vrcp.pop %v1744
        %v1746 = vmul.f32 %v1744, %v1745
        %v1747 = vsub.f32 1.0, %v1746
        %v1748 = vmul.f32 %v1745, %v1747
        %v1749 = vadd.f32 %v1745, %v1748
        %vm1750 = vweird.f32 %v1744
        %vm1751 = vweird.f32 %v1745
        %vm1752 = vmor %vm1750, %vm1751
        %v1753 = vsel %vm1752, %v1745, %v1749
        %v1754 = vand.u32 2147483647, %v1744
        %vm1755 = vcmp.eq.f32.partialorder %v1754, 8.507059e+37
        %v1756 = vand.u32 %v1744, 2147483648
        %v1757 = vor.u32 1.1754944e-38, %v1756
        %v1758 = vsel %vm1755, %v1757, %v1753
        %v1759 = vmul.f32 1.0, %v1758
        %v1760 = vmul.f32 %v1739, %v955
        %v1761 = vmul.f32 %v1720, %v1740
        %v1762 = vadd.f32 %v1760, %v1761
        %v1763 = vtanh.pop %v1762
        %v1764 = vmul.f32 %v1759, %v1763
        %1765 = vst [vmem:[%s11] sm:$0xff] %v1764
        %s1766 = scalar_lea.vmem %s11, 8
        %1767 = vst [vmem:[%s1766] sm:$0xff] %v1762
      $region72: #{bahdanau_decoder_step.2} parent=63 // pred_fallthru
        _
      %s1768 = smul.u32 8, %s24
      %p1769 = scmp.lt.s32.totalorder %s1768, 23
      %s1770 = scalar_select %p1769, %s1768, 23
      %s1771 = smul.addr %s1770, 8
      %s1772 = scalar_lea.vmem %s12, %s1771
      // Predicated region
      $region73: #{bahdanau_decoder_step.2} parent=63 // pred_check
        %p1773 = pneg %p278
      $region74: #{bahdanau_decoder_step.2} parent=63 // pred_check_branch
        %1775 = sbr.rel (%p1773) target = $region76
      $region75: #{bahdanau_decoder_step.2} parent=63 // pred_region
        _
      $region76: #{bahdanau_decoder_step.2} parent=63 // pred_fallthru
        _
      // Predicated region
      $region77: #{bahdanau_decoder_step.2} parent=63 // pred_check
        %p1776 = pneg %p304
      $region78: #{bahdanau_decoder_step.2} parent=63 // pred_check_branch
        %1778 = sbr.rel (%p1776) target = $region80
      $region79: #{bahdanau_decoder_step.2} parent=63 // pred_region
        %s1779 = smul.u32 8, %s24
      $region80: #{bahdanau_decoder_step.2} parent=63 // pred_fallthru
        _
      // Predicated region
      $region81: #{bahdanau_decoder_step.2} parent=63 // pred_check
        %p1780 = pneg %p278
      $region82: #{bahdanau_decoder_step.2} parent=63 // pred_check_branch
        %1782 = sbr.rel (%p1780) target = $region84
      $region83: #{bahdanau_decoder_step.2} parent=63 // pred_region
        _
      $region84: #{bahdanau_decoder_step.2} parent=63 // pred_fallthru
        _
    $region64: #{bahdanau_decoder_step.2} parent=5 // pred_fallthru
      _
    %p1783 = scmp.le.s32.totalorder 2, %s19
    // Predicated region
    $region85: #{bahdanau_decoder_step.2} parent=5 // pred_check
      %p1784 = pneg %p1783
    $region86: #{bahdanau_decoder_step.2} parent=5 // pred_check_branch
      %1786 = sbr.rel (%p1784) target = $region88
    $region87: #{bahdanau_decoder_step.2} parent=5 // pred_region
      %s1787 = ssub.s32 %s19, 2
      // Predicated region
      $region89: #{bahdanau_decoder_step.2} parent=87 // pred_check
        %p1788 = pneg %p310
      $region90: #{bahdanau_decoder_step.2} parent=87 // pred_check_branch
        %1790 = sbr.rel (%p1788) target = $region92
      $region91: #{bahdanau_decoder_step.2} parent=87 // pred_region
        %s1791 = smul.u32 8, %s25
        %p1792 = scmp.lt.s32.totalorder %s1791, 23
        %s1793 = scalar_select %p1792, %s1791, 23
        %s1794 = smul.addr %s1793, 8
        %s1795 = scalar_lea.vmem %s12, %s1794
      $region92: #{bahdanau_decoder_step.2} parent=87 // pred_fallthru
        _
    $region88: #{bahdanau_decoder_step.2} parent=5 // pred_fallthru
      _
  $region6: #{bahdanau_decoder_step.2} parent=0 // loop_footer
    %s23 = sadd.s32 1, %s19
  $region7: #{bahdanau_decoder_step.2} parent=0 // loop_footer_branch
    %18 = sbr.rel target = $region3
  $region8: #{bahdanau_decoder_step.2} parent=0 // loop_exit
    _

</llo_original>
